<compile_context>
chip_gen: v6e
topology: v6e:2x2x1
jax: 0.10.0
libtpu: 0.0.40
codegen_flags: <defaults>
</compile_context>

<pallas_src>
import functools

import jax
import jax.numpy as jnp
from jax.experimental import pallas as pl
from jax.experimental.pallas import tpu as pltpu


def _deform_attn_kernel(snip_ref,                       # SMEM (bz,) scalar prefetch
                        q_ref, v_ref, keep_ref, ref_ref,
                        wv_ref, bv_ref, woff_ref, boff_ref,
                        watt_ref, batt_ref, wout_ref, bout_ref,
                        o_ref, *, H, K, hd, Lv):
    b = pl.program_id(0)

    q = q_ref[0]            # (tq, E)  f32
    val = v_ref[0]          # (Lv, E)  f32
    keep = keep_ref[0]      # (Lv, 1)  1.0 = keep, 0.0 = masked_fill -> 0
    refp = ref_ref[0]       # (tq, 1)
    tq = q.shape[0]

    # --- value projection, all heads at once (bf16 MXU, f32 accumulate) ---
    v_all = jnp.dot(val.astype(jnp.bfloat16), wv_ref[...].astype(jnp.bfloat16),
                    preferred_element_type=jnp.float32) + bv_ref[...]
    v_all = v_all * keep                                      # (Lv, E)

    # --- sampling offsets / attention logits for all heads: (tq, H*K) ---
    # kept in f32: these feed sampling positions, and they are tiny matmuls.
    off = jnp.dot(q, woff_ref[...], preferred_element_type=jnp.float32) + boff_ref[...]
    logits = jnp.dot(q, watt_ref[...], preferred_element_type=jnp.float32) + batt_ref[...]

    # reference_point[..., -1] == 1 branch: ref + off / snippet_num[b]
    inv_snip = 1.0 / snip_ref[b]                              # one scalar divide per step
    grid_pos = refp + off * inv_snip                          # normalized coord in [0, 1]
    # GridSample1d, align_corners=True:  x = (2g-1 + 1)/2 * (Lv-1) = g*(Lv-1)
    pos = grid_pos * (Lv - 1.0)                               # (tq, H*K)

    cols = jax.lax.broadcasted_iota(jnp.int32, (tq, Lv), 1).astype(jnp.float32)

    # --- per-head: build combined interpolation matrix, one MXU matmul each ---
    head_outs = []
    for h in range(H):                                        # H static & small
        pos_h = pos[:, h * K:(h + 1) * K]                     # (tq, K)
        a_h = jax.nn.softmax(logits[:, h * K:(h + 1) * K], axis=-1)
        wcomb = jnp.zeros((tq, Lv), jnp.float32)
        for k in range(K):                                    # K static & small
            p_k = pos_h[:, k:k + 1]                           # (tq, 1)
            a_k = a_h[:, k:k + 1]
            # linear-interp "tent": (1-frac) at x0, frac at x0+1, 0 outside
            # (implements zero padding for out-of-range samples for free)
            w = jnp.maximum(1.0 - jnp.abs(p_k - cols), 0.0)
            wcomb = wcomb + w * a_k
        v_h = v_all[:, h * hd:(h + 1) * hd]                   # (Lv, hd)
        head_outs.append(
            jnp.dot(wcomb.astype(jnp.bfloat16), v_h.astype(jnp.bfloat16),
                    preferred_element_type=jnp.float32))      # (tq, hd)

    head_cat = jnp.concatenate(head_outs, axis=-1)            # (tq, E)

    # --- out_proj on the full concatenated head output ---
    out = jnp.dot(head_cat.astype(jnp.bfloat16), wout_ref[...].astype(jnp.bfloat16),
                  preferred_element_type=jnp.float32) + bout_ref[...]
    o_ref[0] = out


def deformable_attention_pallas(query, value, value_key_padding_mask,
                                reference_point, snippet_num, params,
                                num_heads, K):
    Lq, bz, E = query.shape
    Lv = value.shape[0]
    H = num_heads
    hd = E // H

    # glue: rearrange to batch-major kernel layout
    q_b = jnp.transpose(query, (1, 0, 2)).astype(jnp.float32)              # (bz, Lq, E)
    v_b = jnp.transpose(value, (1, 0, 2)).astype(jnp.float32)              # (bz, Lv, E)
    keep = (1.0 - value_key_padding_mask.astype(jnp.float32))[:, :, None]  # (bz, Lv, 1)
    refp = reference_point.reshape(bz, Lq, 1).astype(jnp.float32)
    snip = snippet_num.reshape(bz).astype(jnp.float32)                     # SMEM scalars

    # glue: un-split weights (torch Linear: y = x @ W.T + b)
    Wv = params["Wv"].T.astype(jnp.float32)                                # (E, E)
    bv = params["bv"].reshape(1, E).astype(jnp.float32)
    Woff = params["Woff"].T.astype(jnp.float32)                            # (E, H*K)
    boff = params["boff"].reshape(1, H * K).astype(jnp.float32)
    Watt = params["Watt"].T.astype(jnp.float32)                            # (E, H*K)
    batt = params["batt"].reshape(1, H * K).astype(jnp.float32)
    Wout = params["Wout"].T.astype(jnp.float32)                            # (E, E)
    bout = params["bout"].reshape(1, E).astype(jnp.float32)

    # tile Lq so the (tq, Lv) interpolation matrix stays bounded in VMEM
    tq = Lq
    for cand in (512, 256, 128):
        if Lq > cand and Lq % cand == 0:
            tq = cand
            break
    n_lq = Lq // tq

    kernel = functools.partial(_deform_attn_kernel, H=H, K=K, hd=hd, Lv=Lv)

    out = pl.pallas_call(
        kernel,
        out_shape=jax.ShapeDtypeStruct((bz, Lq, E), jnp.float32),
        grid_spec=pltpu.PrefetchScalarGridSpec(
            num_scalar_prefetch=1,
            grid=(bz, n_lq),
            in_specs=[
                pl.BlockSpec((1, tq, E), lambda b, l, s: (b, l, 0)),   # query
                pl.BlockSpec((1, Lv, E), lambda b, l, s: (b, 0, 0)),   # value
                pl.BlockSpec((1, Lv, 1), lambda b, l, s: (b, 0, 0)),   # keep mask
                pl.BlockSpec((1, tq, 1), lambda b, l, s: (b, l, 0)),   # reference point
                pl.BlockSpec((E, E),     lambda b, l, s: (0, 0)),      # value_proj W
                pl.BlockSpec((1, E),     lambda b, l, s: (0, 0)),      # value_proj b
                pl.BlockSpec((E, H * K), lambda b, l, s: (0, 0)),      # sampling_offsets W
                pl.BlockSpec((1, H * K), lambda b, l, s: (0, 0)),      # sampling_offsets b
                pl.BlockSpec((E, H * K), lambda b, l, s: (0, 0)),      # atten_weight W
                pl.BlockSpec((1, H * K), lambda b, l, s: (0, 0)),      # atten_weight b
                pl.BlockSpec((E, E),     lambda b, l, s: (0, 0)),      # out_proj W
                pl.BlockSpec((1, E),     lambda b, l, s: (0, 0)),      # out_proj b
            ],
            out_specs=pl.BlockSpec((1, tq, E), lambda b, l, s: (b, l, 0)),
        ),
        compiler_params=pltpu.CompilerParams(
            dimension_semantics=("parallel", "parallel")),
    )(snip, q_b, v_b, keep, refp, Wv, bv, Woff, boff, Watt, batt, Wout, bout)

    return jnp.transpose(out, (1, 0, 2))   # (Lq, bz, E) like the PyTorch module


def deformable_attention_ref(query, value, value_key_padding_mask,
                             reference_point, snippet_num, params,
                             num_heads, K):
    """Plain-JAX (f32) reference mirroring the PyTorch forward exactly."""
    Lq, bz, E = query.shape
    Lv = value.shape[0]
    H = num_heads
    hd = E // H

    v = value.reshape(Lv * bz, E) @ params["Wv"].T + params["bv"]
    v = v.reshape(Lv, bz, E)
    v = jnp.where(value_key_padding_mask.T[:, :, None], 0.0, v)
    v = jnp.transpose(v, (1, 2, 0)).reshape(bz * H, hd, Lv)

    qf = query.reshape(Lq * bz, E)
    off = (qf @ params["Woff"].T + params["boff"]).reshape(Lq, bz, H, K)
    off = jnp.transpose(off, (1, 2, 0, 3))
    off = reference_point.reshape(bz, 1, Lq, 1) + off / snippet_num.reshape(-1, 1, 1, 1)
    g = (off * 2.0 - 1.0).reshape(bz * H, Lq * K)

    aw = (qf @ params["Watt"].T + params["batt"]).reshape(Lq, bz, H, K)
    aw = jnp.transpose(aw, (1, 2, 0, 3))
    aw = jax.nn.softmax(aw, axis=-1).reshape(bz * H * Lq, K, 1)

    # GridSample1d: align_corners=True, zero padding
    pos = (g + 1.0) * 0.5 * (Lv - 1)
    x0 = jnp.floor(pos).astype(jnp.int32)
    frac = pos - x0.astype(jnp.float32)

    def gather(vc, idx):
        valid = ((idx >= 0) & (idx <= Lv - 1)).astype(jnp.float32)
        return vc[:, jnp.clip(idx, 0, Lv - 1)] * valid[None, :]

    def sample_one(vc, i0, fr):
        return gather(vc, i0) * (1.0 - fr)[None, :] + gather(vc, i0 + 1) * fr[None, :]

    sampled = jax.vmap(sample_one)(v, x0, frac)                    # (bz*H, hd, Lq*K)
    sampled = sampled.reshape(bz * H, hd, Lq, K)
    sampled = jnp.transpose(sampled, (0, 2, 1, 3)).reshape(bz * H * Lq, hd, K)

    attn_out = jnp.matmul(sampled, aw).reshape(bz, H, Lq, hd)
    attn_out = jnp.transpose(attn_out, (2, 0, 1, 3)).reshape(Lq, bz, E)
    return attn_out @ params["Wout"].T + params["bout"]


if __name__ == "__main__":
    # small deterministic config
    embed_dim, num_heads, K = 32, 4, 4
    Lq, Lv, bz = 8, 16, 2
    E, H, hd = embed_dim, num_heads, embed_dim // num_heads

    key = jax.random.PRNGKey(0)
    ks = jax.random.split(key, 12)

    params = {
        "Wv":   jax.random.normal(ks[0], (E, E), jnp.float32) * 0.1,
        "bv":   jax.random.normal(ks[1], (E,), jnp.float32) * 0.1,
        "Woff": jax.random.normal(ks[2], (H * K, E), jnp.float32) * 0.1,
        "boff": jax.random.normal(ks[3], (H * K,), jnp.float32) * 0.1,
        "Watt": jax.random.normal(ks[4], (H * K, E), jnp.float32) * 0.1,
        "batt": jax.random.normal(ks[5], (H * K,), jnp.float32) * 0.1,
        "Wout": jax.random.normal(ks[6], (E, E), jnp.float32) * 0.1,
        "bout": jax.random.normal(ks[7], (E,), jnp.float32) * 0.1,
    }

    query = jax.random.normal(ks[8], (Lq, bz, E), jnp.float32)
    value = jax.random.normal(ks[9], (Lv, bz, E), jnp.float32)
    # mask out the last two value positions of every batch (deterministic)
    value_key_padding_mask = jnp.zeros((bz, Lv), bool).at[:, Lv - 2:].set(True)
    reference_point = jax.random.uniform(ks[10], (bz, Lq, 1), jnp.float32)   # last-dim==1 branch
    snippet_num = jnp.array([float(Lv), float(Lv - 4)], jnp.float32)

    out = deformable_attention_pallas(query, value, value_key_padding_mask,
                                      reference_point, snippet_num, params,
                                      num_heads, K)
    out = jax.block_until_ready(out)

    ref = deformable_attention_ref(query, value, value_key_padding_mask,
                                   reference_point, snippet_num, params,
                                   num_heads, K)
    assert out.shape == (Lq, bz, E)
    # bf16 MXU operands -> looser tolerance than the pure-f32 variant
    assert jnp.allclose(out, ref, rtol=2e-2, atol=2e-2), \
        f"max abs err {jnp.max(jnp.abs(out - ref))}"

    print("KERNEL_OK")
</pallas_src>

<mosaic_0001>
module attributes {stable_mosaic.version = 11 : i64} {
  func.func @_deform_attn_kernel(%arg0: i32, %arg1: i32, %arg2: memref<2xf32, #tpu.memory_space<smem>>, %arg3: memref<1x8x32xf32, #tpu.memory_space<vmem>>, %arg4: memref<1x16x32xf32, #tpu.memory_space<vmem>>, %arg5: memref<1x16x1xf32, #tpu.memory_space<vmem>>, %arg6: memref<1x8x1xf32, #tpu.memory_space<vmem>>, %arg7: memref<32x32xf32, #tpu.memory_space<vmem>>, %arg8: memref<1x32xf32, #tpu.memory_space<vmem>>, %arg9: memref<32x16xf32, #tpu.memory_space<vmem>>, %arg10: memref<1x16xf32, #tpu.memory_space<vmem>>, %arg11: memref<32x16xf32, #tpu.memory_space<vmem>>, %arg12: memref<1x16xf32, #tpu.memory_space<vmem>>, %arg13: memref<32x32xf32, #tpu.memory_space<vmem>>, %arg14: memref<1x32xf32, #tpu.memory_space<vmem>>, %arg15: memref<1x8x32xf32, #tpu.memory_space<vmem>>) attributes {dimension_semantics = [#tpu.dimension_semantics<parallel>, #tpu.dimension_semantics<parallel>], iteration_bounds = array<i64: 2, 1>, scalar_prefetch = 1 : i64, scratch_operands = 0 : i64, tpu.core_type = #tpu.core_type<tc>, window_params = [{transform_indices = @transform_0, window_bounds = array<i64: 1, 8, 32>}, {transform_indices = @transform_1, window_bounds = array<i64: 1, 16, 32>}, {transform_indices = @transform_2, window_bounds = array<i64: 1, 16, 1>}, {transform_indices = @transform_3, window_bounds = array<i64: 1, 8, 1>}, {pipeline_mode = #tpu.pipeline_mode<synchronous>, transform_indices = @transform_4, window_bounds = array<i64: 32, 32>}, {pipeline_mode = #tpu.pipeline_mode<synchronous>, transform_indices = @transform_5, window_bounds = array<i64: 1, 32>}, {pipeline_mode = #tpu.pipeline_mode<synchronous>, transform_indices = @transform_6, window_bounds = array<i64: 32, 16>}, {pipeline_mode = #tpu.pipeline_mode<synchronous>, transform_indices = @transform_7, window_bounds = array<i64: 1, 16>}, {pipeline_mode = #tpu.pipeline_mode<synchronous>, transform_indices = @transform_8, window_bounds = array<i64: 32, 16>}, {pipeline_mode = #tpu.pipeline_mode<synchronous>, transform_indices = @transform_9, window_bounds = array<i64: 1, 16>}, {pipeline_mode = #tpu.pipeline_mode<synchronous>, transform_indices = @transform_10, window_bounds = array<i64: 32, 32>}, {pipeline_mode = #tpu.pipeline_mode<synchronous>, transform_indices = @transform_11, window_bounds = array<i64: 1, 32>}, {transform_indices = @transform_12, window_bounds = array<i64: 1, 8, 32>}]} {
    %c0 = arith.constant 0 : index
    %c0_0 = arith.constant 0 : index
    %c0_1 = arith.constant 0 : index
    %0 = vector.load %arg3[%c0, %c0_0, %c0_1] : memref<1x8x32xf32, #tpu.memory_space<vmem>>, vector<1x8x32xf32>
    %1 = vector.shape_cast %0 : vector<1x8x32xf32> to vector<8x32xf32>
    %c0_2 = arith.constant 0 : index
    %c0_3 = arith.constant 0 : index
    %c0_4 = arith.constant 0 : index
    %2 = vector.load %arg4[%c0_2, %c0_3, %c0_4] : memref<1x16x32xf32, #tpu.memory_space<vmem>>, vector<1x16x32xf32>
    %3 = vector.shape_cast %2 : vector<1x16x32xf32> to vector<16x32xf32>
    %c0_5 = arith.constant 0 : index
    %c0_6 = arith.constant 0 : index
    %c0_7 = arith.constant 0 : index
    %4 = vector.load %arg5[%c0_5, %c0_6, %c0_7] : memref<1x16x1xf32, #tpu.memory_space<vmem>>, vector<1x16x1xf32>
    %5 = vector.shape_cast %4 : vector<1x16x1xf32> to vector<16x1xf32>
    %c0_8 = arith.constant 0 : index
    %c0_9 = arith.constant 0 : index
    %c0_10 = arith.constant 0 : index
    %6 = vector.load %arg6[%c0_8, %c0_9, %c0_10] : memref<1x8x1xf32, #tpu.memory_space<vmem>>, vector<1x8x1xf32>
    %7 = vector.shape_cast %6 : vector<1x8x1xf32> to vector<8x1xf32>
    %8 = arith.truncf %3 : vector<16x32xf32> to vector<16x32xbf16>
    %c0_11 = arith.constant 0 : index
    %c0_12 = arith.constant 0 : index
    %9 = vector.load %arg7[%c0_11, %c0_12] : memref<32x32xf32, #tpu.memory_space<vmem>>, vector<32x32xf32>
    %10 = arith.truncf %9 : vector<32x32xf32> to vector<32x32xbf16>
    %cst = arith.constant dense<0.000000e+00> : vector<16x32xf32>
    %11 = tpu.matmul %8, %10, %cst {dimension_numbers = #tpu.dot_dimension_numbers<[1], [0], [0], [1], [0, 0, 1, 1], [], []>} : vector<16x32xbf16>, vector<32x32xbf16>, vector<16x32xf32> -> vector<16x32xf32>
    %c0_13 = arith.constant 0 : index
    %c0_14 = arith.constant 0 : index
    %12 = vector.load %arg8[%c0_13, %c0_14] : memref<1x32xf32, #tpu.memory_space<vmem>>, vector<1x32xf32>
    %13 = vector.broadcast %12 : vector<1x32xf32> to vector<16x32xf32>
    %14 = arith.addf %11, %13 : vector<16x32xf32>
    %15 = vector.broadcast %5 : vector<16x1xf32> to vector<16x32xf32>
    %16 = arith.mulf %14, %15 : vector<16x32xf32>
    %c0_15 = arith.constant 0 : index
    %c0_16 = arith.constant 0 : index
    %17 = vector.load %arg9[%c0_15, %c0_16] : memref<32x16xf32, #tpu.memory_space<vmem>>, vector<32x16xf32>
    %cst_17 = arith.constant dense<0.000000e+00> : vector<8x16xf32>
    %18 = tpu.matmul %1, %17, %cst_17 {dimension_numbers = #tpu.dot_dimension_numbers<[1], [0], [0], [1], [0, 0, 1, 1], [], []>} : vector<8x32xf32>, vector<32x16xf32>, vector<8x16xf32> -> vector<8x16xf32>
    %c0_18 = arith.constant 0 : index
    %c0_19 = arith.constant 0 : index
    %19 = vector.load %arg10[%c0_18, %c0_19] : memref<1x16xf32, #tpu.memory_space<vmem>>, vector<1x16xf32>
    %20 = vector.broadcast %19 : vector<1x16xf32> to vector<8x16xf32>
    %21 = arith.addf %18, %20 : vector<8x16xf32>
    %c0_20 = arith.constant 0 : index
    %c0_21 = arith.constant 0 : index
    %22 = vector.load %arg11[%c0_20, %c0_21] : memref<32x16xf32, #tpu.memory_space<vmem>>, vector<32x16xf32>
    %cst_22 = arith.constant dense<0.000000e+00> : vector<8x16xf32>
    %23 = tpu.matmul %1, %22, %cst_22 {dimension_numbers = #tpu.dot_dimension_numbers<[1], [0], [0], [1], [0, 0, 1, 1], [], []>} : vector<8x32xf32>, vector<32x16xf32>, vector<8x16xf32> -> vector<8x16xf32>
    %c0_23 = arith.constant 0 : index
    %c0_24 = arith.constant 0 : index
    %24 = vector.load %arg12[%c0_23, %c0_24] : memref<1x16xf32, #tpu.memory_space<vmem>>, vector<1x16xf32>
    %25 = vector.broadcast %24 : vector<1x16xf32> to vector<8x16xf32>
    %26 = arith.addf %23, %25 : vector<8x16xf32>
    %27 = arith.index_cast %arg0 : i32 to index
    %28 = memref.load %arg2[%27] : memref<2xf32, #tpu.memory_space<smem>>
    %cst_25 = arith.constant 1.000000e+00 : f32
    %29 = arith.divf %cst_25, %28 : f32
    %30 = vector.broadcast %29 : f32 to vector<8x16xf32>
    %31 = arith.mulf %21, %30 : vector<8x16xf32>
    %32 = vector.broadcast %7 : vector<8x1xf32> to vector<8x16xf32>
    %33 = arith.addf %32, %31 : vector<8x16xf32>
    %cst_26 = arith.constant 1.500000e+01 : f32
    %34 = vector.broadcast %cst_26 : f32 to vector<8x16xf32>
    %35 = arith.mulf %33, %34 : vector<8x16xf32>
    %36 = tpu.iota {dimensions = array<i32: 1>} : vector<8x16xi32>
    %37 = arith.sitofp %36 : vector<8x16xi32> to vector<8x16xf32>
    %38 = vector.extract_strided_slice %35 {offsets = [0, 0], sizes = [8, 4], strides = [1, 1]} : vector<8x16xf32> to vector<8x4xf32>
    %39 = vector.extract_strided_slice %26 {offsets = [0, 0], sizes = [8, 4], strides = [1, 1]} : vector<8x16xf32> to vector<8x4xf32>
    %cst_27 = arith.constant dense<0xFF800000> : vector<8xf32>
    %40 = vector.multi_reduction <maximumf>, %39, %cst_27 [1] : vector<8x4xf32> to vector<8xf32>
    %cst_28 = arith.constant 0xFF800000 : f32
    %41 = vector.broadcast %cst_28 : f32 to vector<8xf32>
    %42 = arith.maximumf %41, %40 : vector<8xf32>
    %43 = vector.shape_cast %42 : vector<8xf32> to vector<8x1xf32>
    %44 = vector.broadcast %43 : vector<8x1xf32> to vector<8x4xf32>
    %45 = arith.subf %39, %44 : vector<8x4xf32>
    %46 = math.exp %45 : vector<8x4xf32>
    %cst_29 = arith.constant dense<0.000000e+00> : vector<8xf32>
    %47 = vector.multi_reduction <add>, %46, %cst_29 [1] : vector<8x4xf32> to vector<8xf32>
    %48 = vector.shape_cast %47 : vector<8xf32> to vector<8x1xf32>
    %49 = vector.broadcast %48 : vector<8x1xf32> to vector<8x4xf32>
    %50 = arith.divf %46, %49 : vector<8x4xf32>
    %cst_30 = arith.constant 0.000000e+00 : f32
    %51 = vector.broadcast %cst_30 : f32 to vector<8x16xf32>
    %52 = vector.extract_strided_slice %38 {offsets = [0, 0], sizes = [8, 1], strides = [1, 1]} : vector<8x4xf32> to vector<8x1xf32>
    %53 = vector.extract_strided_slice %50 {offsets = [0, 0], sizes = [8, 1], strides = [1, 1]} : vector<8x4xf32> to vector<8x1xf32>
    %54 = vector.broadcast %52 : vector<8x1xf32> to vector<8x16xf32>
    %55 = arith.subf %54, %37 : vector<8x16xf32>
    %56 = math.absf %55 : vector<8x16xf32>
    %cst_31 = arith.constant 1.000000e+00 : f32
    %57 = vector.broadcast %cst_31 : f32 to vector<8x16xf32>
    %58 = arith.subf %57, %56 : vector<8x16xf32>
    %cst_32 = arith.constant 0.000000e+00 : f32
    %59 = vector.broadcast %cst_32 : f32 to vector<8x16xf32>
    %60 = arith.maximumf %58, %59 : vector<8x16xf32>
    %61 = vector.broadcast %53 : vector<8x1xf32> to vector<8x16xf32>
    %62 = arith.mulf %60, %61 : vector<8x16xf32>
    %63 = arith.addf %51, %62 : vector<8x16xf32>
    %64 = vector.extract_strided_slice %38 {offsets = [0, 1], sizes = [8, 1], strides = [1, 1]} : vector<8x4xf32> to vector<8x1xf32>
    %65 = vector.extract_strided_slice %50 {offsets = [0, 1], sizes = [8, 1], strides = [1, 1]} : vector<8x4xf32> to vector<8x1xf32>
    %66 = vector.broadcast %64 : vector<8x1xf32> to vector<8x16xf32>
    %67 = arith.subf %66, %37 : vector<8x16xf32>
    %68 = math.absf %67 : vector<8x16xf32>
    %cst_33 = arith.constant 1.000000e+00 : f32
    %69 = vector.broadcast %cst_33 : f32 to vector<8x16xf32>
    %70 = arith.subf %69, %68 : vector<8x16xf32>
    %cst_34 = arith.constant 0.000000e+00 : f32
    %71 = vector.broadcast %cst_34 : f32 to vector<8x16xf32>
    %72 = arith.maximumf %70, %71 : vector<8x16xf32>
    %73 = vector.broadcast %65 : vector<8x1xf32> to vector<8x16xf32>
    %74 = arith.mulf %72, %73 : vector<8x16xf32>
    %75 = arith.addf %63, %74 : vector<8x16xf32>
    %76 = vector.extract_strided_slice %38 {offsets = [0, 2], sizes = [8, 1], strides = [1, 1]} : vector<8x4xf32> to vector<8x1xf32>
    %77 = vector.extract_strided_slice %50 {offsets = [0, 2], sizes = [8, 1], strides = [1, 1]} : vector<8x4xf32> to vector<8x1xf32>
    %78 = vector.broadcast %76 : vector<8x1xf32> to vector<8x16xf32>
    %79 = arith.subf %78, %37 : vector<8x16xf32>
    %80 = math.absf %79 : vector<8x16xf32>
    %cst_35 = arith.constant 1.000000e+00 : f32
    %81 = vector.broadcast %cst_35 : f32 to vector<8x16xf32>
    %82 = arith.subf %81, %80 : vector<8x16xf32>
    %cst_36 = arith.constant 0.000000e+00 : f32
    %83 = vector.broadcast %cst_36 : f32 to vector<8x16xf32>
    %84 = arith.maximumf %82, %83 : vector<8x16xf32>
    %85 = vector.broadcast %77 : vector<8x1xf32> to vector<8x16xf32>
    %86 = arith.mulf %84, %85 : vector<8x16xf32>
    %87 = arith.addf %75, %86 : vector<8x16xf32>
    %88 = vector.extract_strided_slice %38 {offsets = [0, 3], sizes = [8, 1], strides = [1, 1]} : vector<8x4xf32> to vector<8x1xf32>
    %89 = vector.extract_strided_slice %50 {offsets = [0, 3], sizes = [8, 1], strides = [1, 1]} : vector<8x4xf32> to vector<8x1xf32>
    %90 = vector.broadcast %88 : vector<8x1xf32> to vector<8x16xf32>
    %91 = arith.subf %90, %37 : vector<8x16xf32>
    %92 = math.absf %91 : vector<8x16xf32>
    %cst_37 = arith.constant 1.000000e+00 : f32
    %93 = vector.broadcast %cst_37 : f32 to vector<8x16xf32>
    %94 = arith.subf %93, %92 : vector<8x16xf32>
    %cst_38 = arith.constant 0.000000e+00 : f32
    %95 = vector.broadcast %cst_38 : f32 to vector<8x16xf32>
    %96 = arith.maximumf %94, %95 : vector<8x16xf32>
    %97 = vector.broadcast %89 : vector<8x1xf32> to vector<8x16xf32>
    %98 = arith.mulf %96, %97 : vector<8x16xf32>
    %99 = arith.addf %87, %98 : vector<8x16xf32>
    %100 = vector.extract_strided_slice %16 {offsets = [0, 0], sizes = [16, 8], strides = [1, 1]} : vector<16x32xf32> to vector<16x8xf32>
    %101 = arith.truncf %99 : vector<8x16xf32> to vector<8x16xbf16>
    %102 = arith.truncf %100 : vector<16x8xf32> to vector<16x8xbf16>
    %cst_39 = arith.constant dense<0.000000e+00> : vector<8x8xf32>
    %103 = tpu.matmul %101, %102, %cst_39 {dimension_numbers = #tpu.dot_dimension_numbers<[1], [0], [0], [1], [0, 0, 1, 1], [], []>} : vector<8x16xbf16>, vector<16x8xbf16>, vector<8x8xf32> -> vector<8x8xf32>
    %104 = vector.extract_strided_slice %35 {offsets = [0, 4], sizes = [8, 4], strides = [1, 1]} : vector<8x16xf32> to vector<8x4xf32>
    %105 = vector.extract_strided_slice %26 {offsets = [0, 4], sizes = [8, 4], strides = [1, 1]} : vector<8x16xf32> to vector<8x4xf32>
    %cst_40 = arith.constant dense<0xFF800000> : vector<8xf32>
    %106 = vector.multi_reduction <maximumf>, %105, %cst_40 [1] : vector<8x4xf32> to vector<8xf32>
    %cst_41 = arith.constant 0xFF800000 : f32
    %107 = vector.broadcast %cst_41 : f32 to vector<8xf32>
    %108 = arith.maximumf %107, %106 : vector<8xf32>
    %109 = vector.shape_cast %108 : vector<8xf32> to vector<8x1xf32>
    %110 = vector.broadcast %109 : vector<8x1xf32> to vector<8x4xf32>
    %111 = arith.subf %105, %110 : vector<8x4xf32>
    %112 = math.exp %111 : vector<8x4xf32>
    %cst_42 = arith.constant dense<0.000000e+00> : vector<8xf32>
    %113 = vector.multi_reduction <add>, %112, %cst_42 [1] : vector<8x4xf32> to vector<8xf32>
    %114 = vector.shape_cast %113 : vector<8xf32> to vector<8x1xf32>
    %115 = vector.broadcast %114 : vector<8x1xf32> to vector<8x4xf32>
    %116 = arith.divf %112, %115 : vector<8x4xf32>
    %cst_43 = arith.constant 0.000000e+00 : f32
    %117 = vector.broadcast %cst_43 : f32 to vector<8x16xf32>
    %118 = vector.extract_strided_slice %104 {offsets = [0, 0], sizes = [8, 1], strides = [1, 1]} : vector<8x4xf32> to vector<8x1xf32>
    %119 = vector.extract_strided_slice %116 {offsets = [0, 0], sizes = [8, 1], strides = [1, 1]} : vector<8x4xf32> to vector<8x1xf32>
    %120 = vector.broadcast %118 : vector<8x1xf32> to vector<8x16xf32>
    %121 = arith.subf %120, %37 : vector<8x16xf32>
    %122 = math.absf %121 : vector<8x16xf32>
    %cst_44 = arith.constant 1.000000e+00 : f32
    %123 = vector.broadcast %cst_44 : f32 to vector<8x16xf32>
    %124 = arith.subf %123, %122 : vector<8x16xf32>
    %cst_45 = arith.constant 0.000000e+00 : f32
    %125 = vector.broadcast %cst_45 : f32 to vector<8x16xf32>
    %126 = arith.maximumf %124, %125 : vector<8x16xf32>
    %127 = vector.broadcast %119 : vector<8x1xf32> to vector<8x16xf32>
    %128 = arith.mulf %126, %127 : vector<8x16xf32>
    %129 = arith.addf %117, %128 : vector<8x16xf32>
    %130 = vector.extract_strided_slice %104 {offsets = [0, 1], sizes = [8, 1], strides = [1, 1]} : vector<8x4xf32> to vector<8x1xf32>
    %131 = vector.extract_strided_slice %116 {offsets = [0, 1], sizes = [8, 1], strides = [1, 1]} : vector<8x4xf32> to vector<8x1xf32>
    %132 = vector.broadcast %130 : vector<8x1xf32> to vector<8x16xf32>
    %133 = arith.subf %132, %37 : vector<8x16xf32>
    %134 = math.absf %133 : vector<8x16xf32>
    %cst_46 = arith.constant 1.000000e+00 : f32
    %135 = vector.broadcast %cst_46 : f32 to vector<8x16xf32>
    %136 = arith.subf %135, %134 : vector<8x16xf32>
    %cst_47 = arith.constant 0.000000e+00 : f32
    %137 = vector.broadcast %cst_47 : f32 to vector<8x16xf32>
    %138 = arith.maximumf %136, %137 : vector<8x16xf32>
    %139 = vector.broadcast %131 : vector<8x1xf32> to vector<8x16xf32>
    %140 = arith.mulf %138, %139 : vector<8x16xf32>
    %141 = arith.addf %129, %140 : vector<8x16xf32>
    %142 = vector.extract_strided_slice %104 {offsets = [0, 2], sizes = [8, 1], strides = [1, 1]} : vector<8x4xf32> to vector<8x1xf32>
    %143 = vector.extract_strided_slice %116 {offsets = [0, 2], sizes = [8, 1], strides = [1, 1]} : vector<8x4xf32> to vector<8x1xf32>
    %144 = vector.broadcast %142 : vector<8x1xf32> to vector<8x16xf32>
    %145 = arith.subf %144, %37 : vector<8x16xf32>
    %146 = math.absf %145 : vector<8x16xf32>
    %cst_48 = arith.constant 1.000000e+00 : f32
    %147 = vector.broadcast %cst_48 : f32 to vector<8x16xf32>
    %148 = arith.subf %147, %146 : vector<8x16xf32>
    %cst_49 = arith.constant 0.000000e+00 : f32
    %149 = vector.broadcast %cst_49 : f32 to vector<8x16xf32>
    %150 = arith.maximumf %148, %149 : vector<8x16xf32>
    %151 = vector.broadcast %143 : vector<8x1xf32> to vector<8x16xf32>
    %152 = arith.mulf %150, %151 : vector<8x16xf32>
    %153 = arith.addf %141, %152 : vector<8x16xf32>
    %154 = vector.extract_strided_slice %104 {offsets = [0, 3], sizes = [8, 1], strides = [1, 1]} : vector<8x4xf32> to vector<8x1xf32>
    %155 = vector.extract_strided_slice %116 {offsets = [0, 3], sizes = [8, 1], strides = [1, 1]} : vector<8x4xf32> to vector<8x1xf32>
    %156 = vector.broadcast %154 : vector<8x1xf32> to vector<8x16xf32>
    %157 = arith.subf %156, %37 : vector<8x16xf32>
    %158 = math.absf %157 : vector<8x16xf32>
    %cst_50 = arith.constant 1.000000e+00 : f32
    %159 = vector.broadcast %cst_50 : f32 to vector<8x16xf32>
    %160 = arith.subf %159, %158 : vector<8x16xf32>
    %cst_51 = arith.constant 0.000000e+00 : f32
    %161 = vector.broadcast %cst_51 : f32 to vector<8x16xf32>
    %162 = arith.maximumf %160, %161 : vector<8x16xf32>
    %163 = vector.broadcast %155 : vector<8x1xf32> to vector<8x16xf32>
    %164 = arith.mulf %162, %163 : vector<8x16xf32>
    %165 = arith.addf %153, %164 : vector<8x16xf32>
    %166 = vector.extract_strided_slice %16 {offsets = [0, 8], sizes = [16, 8], strides = [1, 1]} : vector<16x32xf32> to vector<16x8xf32>
    %167 = arith.truncf %165 : vector<8x16xf32> to vector<8x16xbf16>
    %168 = arith.truncf %166 : vector<16x8xf32> to vector<16x8xbf16>
    %cst_52 = arith.constant dense<0.000000e+00> : vector<8x8xf32>
    %169 = tpu.matmul %167, %168, %cst_52 {dimension_numbers = #tpu.dot_dimension_numbers<[1], [0], [0], [1], [0, 0, 1, 1], [], []>} : vector<8x16xbf16>, vector<16x8xbf16>, vector<8x8xf32> -> vector<8x8xf32>
    %170 = vector.extract_strided_slice %35 {offsets = [0, 8], sizes = [8, 4], strides = [1, 1]} : vector<8x16xf32> to vector<8x4xf32>
    %171 = vector.extract_strided_slice %26 {offsets = [0, 8], sizes = [8, 4], strides = [1, 1]} : vector<8x16xf32> to vector<8x4xf32>
    %cst_53 = arith.constant dense<0xFF800000> : vector<8xf32>
    %172 = vector.multi_reduction <maximumf>, %171, %cst_53 [1] : vector<8x4xf32> to vector<8xf32>
    %cst_54 = arith.constant 0xFF800000 : f32
    %173 = vector.broadcast %cst_54 : f32 to vector<8xf32>
    %174 = arith.maximumf %173, %172 : vector<8xf32>
    %175 = vector.shape_cast %174 : vector<8xf32> to vector<8x1xf32>
    %176 = vector.broadcast %175 : vector<8x1xf32> to vector<8x4xf32>
    %177 = arith.subf %171, %176 : vector<8x4xf32>
    %178 = math.exp %177 : vector<8x4xf32>
    %cst_55 = arith.constant dense<0.000000e+00> : vector<8xf32>
    %179 = vector.multi_reduction <add>, %178, %cst_55 [1] : vector<8x4xf32> to vector<8xf32>
    %180 = vector.shape_cast %179 : vector<8xf32> to vector<8x1xf32>
    %181 = vector.broadcast %180 : vector<8x1xf32> to vector<8x4xf32>
    %182 = arith.divf %178, %181 : vector<8x4xf32>
    %cst_56 = arith.constant 0.000000e+00 : f32
    %183 = vector.broadcast %cst_56 : f32 to vector<8x16xf32>
    %184 = vector.extract_strided_slice %170 {offsets = [0, 0], sizes = [8, 1], strides = [1, 1]} : vector<8x4xf32> to vector<8x1xf32>
    %185 = vector.extract_strided_slice %182 {offsets = [0, 0], sizes = [8, 1], strides = [1, 1]} : vector<8x4xf32> to vector<8x1xf32>
    %186 = vector.broadcast %184 : vector<8x1xf32> to vector<8x16xf32>
    %187 = arith.subf %186, %37 : vector<8x16xf32>
    %188 = math.absf %187 : vector<8x16xf32>
    %cst_57 = arith.constant 1.000000e+00 : f32
    %189 = vector.broadcast %cst_57 : f32 to vector<8x16xf32>
    %190 = arith.subf %189, %188 : vector<8x16xf32>
    %cst_58 = arith.constant 0.000000e+00 : f32
    %191 = vector.broadcast %cst_58 : f32 to vector<8x16xf32>
    %192 = arith.maximumf %190, %191 : vector<8x16xf32>
    %193 = vector.broadcast %185 : vector<8x1xf32> to vector<8x16xf32>
    %194 = arith.mulf %192, %193 : vector<8x16xf32>
    %195 = arith.addf %183, %194 : vector<8x16xf32>
    %196 = vector.extract_strided_slice %170 {offsets = [0, 1], sizes = [8, 1], strides = [1, 1]} : vector<8x4xf32> to vector<8x1xf32>
    %197 = vector.extract_strided_slice %182 {offsets = [0, 1], sizes = [8, 1], strides = [1, 1]} : vector<8x4xf32> to vector<8x1xf32>
    %198 = vector.broadcast %196 : vector<8x1xf32> to vector<8x16xf32>
    %199 = arith.subf %198, %37 : vector<8x16xf32>
    %200 = math.absf %199 : vector<8x16xf32>
    %cst_59 = arith.constant 1.000000e+00 : f32
    %201 = vector.broadcast %cst_59 : f32 to vector<8x16xf32>
    %202 = arith.subf %201, %200 : vector<8x16xf32>
    %cst_60 = arith.constant 0.000000e+00 : f32
    %203 = vector.broadcast %cst_60 : f32 to vector<8x16xf32>
    %204 = arith.maximumf %202, %203 : vector<8x16xf32>
    %205 = vector.broadcast %197 : vector<8x1xf32> to vector<8x16xf32>
    %206 = arith.mulf %204, %205 : vector<8x16xf32>
    %207 = arith.addf %195, %206 : vector<8x16xf32>
    %208 = vector.extract_strided_slice %170 {offsets = [0, 2], sizes = [8, 1], strides = [1, 1]} : vector<8x4xf32> to vector<8x1xf32>
    %209 = vector.extract_strided_slice %182 {offsets = [0, 2], sizes = [8, 1], strides = [1, 1]} : vector<8x4xf32> to vector<8x1xf32>
    %210 = vector.broadcast %208 : vector<8x1xf32> to vector<8x16xf32>
    %211 = arith.subf %210, %37 : vector<8x16xf32>
    %212 = math.absf %211 : vector<8x16xf32>
    %cst_61 = arith.constant 1.000000e+00 : f32
    %213 = vector.broadcast %cst_61 : f32 to vector<8x16xf32>
    %214 = arith.subf %213, %212 : vector<8x16xf32>
    %cst_62 = arith.constant 0.000000e+00 : f32
    %215 = vector.broadcast %cst_62 : f32 to vector<8x16xf32>
    %216 = arith.maximumf %214, %215 : vector<8x16xf32>
    %217 = vector.broadcast %209 : vector<8x1xf32> to vector<8x16xf32>
    %218 = arith.mulf %216, %217 : vector<8x16xf32>
    %219 = arith.addf %207, %218 : vector<8x16xf32>
    %220 = vector.extract_strided_slice %170 {offsets = [0, 3], sizes = [8, 1], strides = [1, 1]} : vector<8x4xf32> to vector<8x1xf32>
    %221 = vector.extract_strided_slice %182 {offsets = [0, 3], sizes = [8, 1], strides = [1, 1]} : vector<8x4xf32> to vector<8x1xf32>
    %222 = vector.broadcast %220 : vector<8x1xf32> to vector<8x16xf32>
    %223 = arith.subf %222, %37 : vector<8x16xf32>
    %224 = math.absf %223 : vector<8x16xf32>
    %cst_63 = arith.constant 1.000000e+00 : f32
    %225 = vector.broadcast %cst_63 : f32 to vector<8x16xf32>
    %226 = arith.subf %225, %224 : vector<8x16xf32>
    %cst_64 = arith.constant 0.000000e+00 : f32
    %227 = vector.broadcast %cst_64 : f32 to vector<8x16xf32>
    %228 = arith.maximumf %226, %227 : vector<8x16xf32>
    %229 = vector.broadcast %221 : vector<8x1xf32> to vector<8x16xf32>
    %230 = arith.mulf %228, %229 : vector<8x16xf32>
    %231 = arith.addf %219, %230 : vector<8x16xf32>
    %232 = vector.extract_strided_slice %16 {offsets = [0, 16], sizes = [16, 8], strides = [1, 1]} : vector<16x32xf32> to vector<16x8xf32>
    %233 = arith.truncf %231 : vector<8x16xf32> to vector<8x16xbf16>
    %234 = arith.truncf %232 : vector<16x8xf32> to vector<16x8xbf16>
    %cst_65 = arith.constant dense<0.000000e+00> : vector<8x8xf32>
    %235 = tpu.matmul %233, %234, %cst_65 {dimension_numbers = #tpu.dot_dimension_numbers<[1], [0], [0], [1], [0, 0, 1, 1], [], []>} : vector<8x16xbf16>, vector<16x8xbf16>, vector<8x8xf32> -> vector<8x8xf32>
    %236 = vector.extract_strided_slice %35 {offsets = [0, 12], sizes = [8, 4], strides = [1, 1]} : vector<8x16xf32> to vector<8x4xf32>
    %237 = vector.extract_strided_slice %26 {offsets = [0, 12], sizes = [8, 4], strides = [1, 1]} : vector<8x16xf32> to vector<8x4xf32>
    %cst_66 = arith.constant dense<0xFF800000> : vector<8xf32>
    %238 = vector.multi_reduction <maximumf>, %237, %cst_66 [1] : vector<8x4xf32> to vector<8xf32>
    %cst_67 = arith.constant 0xFF800000 : f32
    %239 = vector.broadcast %cst_67 : f32 to vector<8xf32>
    %240 = arith.maximumf %239, %238 : vector<8xf32>
    %241 = vector.shape_cast %240 : vector<8xf32> to vector<8x1xf32>
    %242 = vector.broadcast %241 : vector<8x1xf32> to vector<8x4xf32>
    %243 = arith.subf %237, %242 : vector<8x4xf32>
    %244 = math.exp %243 : vector<8x4xf32>
    %cst_68 = arith.constant dense<0.000000e+00> : vector<8xf32>
    %245 = vector.multi_reduction <add>, %244, %cst_68 [1] : vector<8x4xf32> to vector<8xf32>
    %246 = vector.shape_cast %245 : vector<8xf32> to vector<8x1xf32>
    %247 = vector.broadcast %246 : vector<8x1xf32> to vector<8x4xf32>
    %248 = arith.divf %244, %247 : vector<8x4xf32>
    %cst_69 = arith.constant 0.000000e+00 : f32
    %249 = vector.broadcast %cst_69 : f32 to vector<8x16xf32>
    %250 = vector.extract_strided_slice %236 {offsets = [0, 0], sizes = [8, 1], strides = [1, 1]} : vector<8x4xf32> to vector<8x1xf32>
    %251 = vector.extract_strided_slice %248 {offsets = [0, 0], sizes = [8, 1], strides = [1, 1]} : vector<8x4xf32> to vector<8x1xf32>
    %252 = vector.broadcast %250 : vector<8x1xf32> to vector<8x16xf32>
    %253 = arith.subf %252, %37 : vector<8x16xf32>
    %254 = math.absf %253 : vector<8x16xf32>
    %cst_70 = arith.constant 1.000000e+00 : f32
    %255 = vector.broadcast %cst_70 : f32 to vector<8x16xf32>
    %256 = arith.subf %255, %254 : vector<8x16xf32>
    %cst_71 = arith.constant 0.000000e+00 : f32
    %257 = vector.broadcast %cst_71 : f32 to vector<8x16xf32>
    %258 = arith.maximumf %256, %257 : vector<8x16xf32>
    %259 = vector.broadcast %251 : vector<8x1xf32> to vector<8x16xf32>
    %260 = arith.mulf %258, %259 : vector<8x16xf32>
    %261 = arith.addf %249, %260 : vector<8x16xf32>
    %262 = vector.extract_strided_slice %236 {offsets = [0, 1], sizes = [8, 1], strides = [1, 1]} : vector<8x4xf32> to vector<8x1xf32>
    %263 = vector.extract_strided_slice %248 {offsets = [0, 1], sizes = [8, 1], strides = [1, 1]} : vector<8x4xf32> to vector<8x1xf32>
    %264 = vector.broadcast %262 : vector<8x1xf32> to vector<8x16xf32>
    %265 = arith.subf %264, %37 : vector<8x16xf32>
    %266 = math.absf %265 : vector<8x16xf32>
    %cst_72 = arith.constant 1.000000e+00 : f32
    %267 = vector.broadcast %cst_72 : f32 to vector<8x16xf32>
    %268 = arith.subf %267, %266 : vector<8x16xf32>
    %cst_73 = arith.constant 0.000000e+00 : f32
    %269 = vector.broadcast %cst_73 : f32 to vector<8x16xf32>
    %270 = arith.maximumf %268, %269 : vector<8x16xf32>
    %271 = vector.broadcast %263 : vector<8x1xf32> to vector<8x16xf32>
    %272 = arith.mulf %270, %271 : vector<8x16xf32>
    %273 = arith.addf %261, %272 : vector<8x16xf32>
    %274 = vector.extract_strided_slice %236 {offsets = [0, 2], sizes = [8, 1], strides = [1, 1]} : vector<8x4xf32> to vector<8x1xf32>
    %275 = vector.extract_strided_slice %248 {offsets = [0, 2], sizes = [8, 1], strides = [1, 1]} : vector<8x4xf32> to vector<8x1xf32>
    %276 = vector.broadcast %274 : vector<8x1xf32> to vector<8x16xf32>
    %277 = arith.subf %276, %37 : vector<8x16xf32>
    %278 = math.absf %277 : vector<8x16xf32>
    %cst_74 = arith.constant 1.000000e+00 : f32
    %279 = vector.broadcast %cst_74 : f32 to vector<8x16xf32>
    %280 = arith.subf %279, %278 : vector<8x16xf32>
    %cst_75 = arith.constant 0.000000e+00 : f32
    %281 = vector.broadcast %cst_75 : f32 to vector<8x16xf32>
    %282 = arith.maximumf %280, %281 : vector<8x16xf32>
    %283 = vector.broadcast %275 : vector<8x1xf32> to vector<8x16xf32>
    %284 = arith.mulf %282, %283 : vector<8x16xf32>
    %285 = arith.addf %273, %284 : vector<8x16xf32>
    %286 = vector.extract_strided_slice %236 {offsets = [0, 3], sizes = [8, 1], strides = [1, 1]} : vector<8x4xf32> to vector<8x1xf32>
    %287 = vector.extract_strided_slice %248 {offsets = [0, 3], sizes = [8, 1], strides = [1, 1]} : vector<8x4xf32> to vector<8x1xf32>
    %288 = vector.broadcast %286 : vector<8x1xf32> to vector<8x16xf32>
    %289 = arith.subf %288, %37 : vector<8x16xf32>
    %290 = math.absf %289 : vector<8x16xf32>
    %cst_76 = arith.constant 1.000000e+00 : f32
    %291 = vector.broadcast %cst_76 : f32 to vector<8x16xf32>
    %292 = arith.subf %291, %290 : vector<8x16xf32>
    %cst_77 = arith.constant 0.000000e+00 : f32
    %293 = vector.broadcast %cst_77 : f32 to vector<8x16xf32>
    %294 = arith.maximumf %292, %293 : vector<8x16xf32>
    %295 = vector.broadcast %287 : vector<8x1xf32> to vector<8x16xf32>
    %296 = arith.mulf %294, %295 : vector<8x16xf32>
    %297 = arith.addf %285, %296 : vector<8x16xf32>
    %298 = vector.extract_strided_slice %16 {offsets = [0, 24], sizes = [16, 8], strides = [1, 1]} : vector<16x32xf32> to vector<16x8xf32>
    %299 = arith.truncf %297 : vector<8x16xf32> to vector<8x16xbf16>
    %300 = arith.truncf %298 : vector<16x8xf32> to vector<16x8xbf16>
    %cst_78 = arith.constant dense<0.000000e+00> : vector<8x8xf32>
    %301 = tpu.matmul %299, %300, %cst_78 {dimension_numbers = #tpu.dot_dimension_numbers<[1], [0], [0], [1], [0, 0, 1, 1], [], []>} : vector<8x16xbf16>, vector<16x8xbf16>, vector<8x8xf32> -> vector<8x8xf32>
    %302 = tpu.concatenate %103, %169, %235, %301 in 1 : vector<8x8xf32>, vector<8x8xf32>, vector<8x8xf32>, vector<8x8xf32> -> vector<8x32xf32>
    %303 = arith.truncf %302 : vector<8x32xf32> to vector<8x32xbf16>
    %c0_79 = arith.constant 0 : index
    %c0_80 = arith.constant 0 : index
    %304 = vector.load %arg13[%c0_79, %c0_80] : memref<32x32xf32, #tpu.memory_space<vmem>>, vector<32x32xf32>
    %305 = arith.truncf %304 : vector<32x32xf32> to vector<32x32xbf16>
    %cst_81 = arith.constant dense<0.000000e+00> : vector<8x32xf32>
    %306 = tpu.matmul %303, %305, %cst_81 {dimension_numbers = #tpu.dot_dimension_numbers<[1], [0], [0], [1], [0, 0, 1, 1], [], []>} : vector<8x32xbf16>, vector<32x32xbf16>, vector<8x32xf32> -> vector<8x32xf32>
    %c0_82 = arith.constant 0 : index
    %c0_83 = arith.constant 0 : index
    %307 = vector.load %arg14[%c0_82, %c0_83] : memref<1x32xf32, #tpu.memory_space<vmem>>, vector<1x32xf32>
    %308 = vector.broadcast %307 : vector<1x32xf32> to vector<8x32xf32>
    %309 = arith.addf %306, %308 : vector<8x32xf32>
    %c0_84 = arith.constant 0 : index
    %c0_85 = arith.constant 0 : index
    %c0_86 = arith.constant 0 : index
    %310 = vector.load %arg15[%c0_84, %c0_85, %c0_86] : memref<1x8x32xf32, #tpu.memory_space<vmem>>, vector<1x8x32xf32>
    %311 = vector.shape_cast %310 : vector<1x8x32xf32> to vector<8x32xf32>
    %312 = vector.shape_cast %309 : vector<8x32xf32> to vector<1x8x32xf32>
    tpu.vector_store %arg15[%c0_84, %c0_85, %c0_86], %312 {strides = array<i32>} : memref<1x8x32xf32, #tpu.memory_space<vmem>>, vector<1x8x32xf32>,
    return
  }
  func.func @transform_0(%arg0: i32, %arg1: i32, %arg2: memref<2xf32, #tpu.memory_space<smem>>) -> (i32, i32, i32) {
    %c0_i32 = arith.constant 0 : i32
    %c0_i32_0 = arith.constant 0 : i32
    return %arg0, %arg1, %c0_i32 : i32, i32, i32
  }
  func.func @transform_1(%arg0: i32, %arg1: i32, %arg2: memref<2xf32, #tpu.memory_space<smem>>) -> (i32, i32, i32) {
    %c0_i32 = arith.constant 0 : i32
    %c0_i32_0 = arith.constant 0 : i32
    %c0_i32_1 = arith.constant 0 : i32
    return %arg0, %c0_i32, %c0_i32_0 : i32, i32, i32
  }
  func.func @transform_2(%arg0: i32, %arg1: i32, %arg2: memref<2xf32, #tpu.memory_space<smem>>) -> (i32, i32, i32) {
    %c0_i32 = arith.constant 0 : i32
    %c0_i32_0 = arith.constant 0 : i32
    %c0_i32_1 = arith.constant 0 : i32
    return %arg0, %c0_i32, %c0_i32_0 : i32, i32, i32
  }
  func.func @transform_3(%arg0: i32, %arg1: i32, %arg2: memref<2xf32, #tpu.memory_space<smem>>) -> (i32, i32, i32) {
    %c0_i32 = arith.constant 0 : i32
    %c0_i32_0 = arith.constant 0 : i32
    return %arg0, %arg1, %c0_i32 : i32, i32, i32
  }
  func.func @transform_4(%arg0: i32, %arg1: i32, %arg2: memref<2xf32, #tpu.memory_space<smem>>) -> (i32, i32) {
    %c0_i32 = arith.constant 0 : i32
    %c0_i32_0 = arith.constant 0 : i32
    %c0_i32_1 = arith.constant 0 : i32
    return %c0_i32, %c0_i32_0 : i32, i32
  }
  func.func @transform_5(%arg0: i32, %arg1: i32, %arg2: memref<2xf32, #tpu.memory_space<smem>>) -> (i32, i32) {
    %c0_i32 = arith.constant 0 : i32
    %c0_i32_0 = arith.constant 0 : i32
    %c0_i32_1 = arith.constant 0 : i32
    return %c0_i32, %c0_i32_0 : i32, i32
  }
  func.func @transform_6(%arg0: i32, %arg1: i32, %arg2: memref<2xf32, #tpu.memory_space<smem>>) -> (i32, i32) {
    %c0_i32 = arith.constant 0 : i32
    %c0_i32_0 = arith.constant 0 : i32
    %c0_i32_1 = arith.constant 0 : i32
    return %c0_i32, %c0_i32_0 : i32, i32
  }
  func.func @transform_7(%arg0: i32, %arg1: i32, %arg2: memref<2xf32, #tpu.memory_space<smem>>) -> (i32, i32) {
    %c0_i32 = arith.constant 0 : i32
    %c0_i32_0 = arith.constant 0 : i32
    %c0_i32_1 = arith.constant 0 : i32
    return %c0_i32, %c0_i32_0 : i32, i32
  }
  func.func @transform_8(%arg0: i32, %arg1: i32, %arg2: memref<2xf32, #tpu.memory_space<smem>>) -> (i32, i32) {
    %c0_i32 = arith.constant 0 : i32
    %c0_i32_0 = arith.constant 0 : i32
    %c0_i32_1 = arith.constant 0 : i32
    return %c0_i32, %c0_i32_0 : i32, i32
  }
  func.func @transform_9(%arg0: i32, %arg1: i32, %arg2: memref<2xf32, #tpu.memory_space<smem>>) -> (i32, i32) {
    %c0_i32 = arith.constant 0 : i32
    %c0_i32_0 = arith.constant 0 : i32
    %c0_i32_1 = arith.constant 0 : i32
    return %c0_i32, %c0_i32_0 : i32, i32
  }
  func.func @transform_10(%arg0: i32, %arg1: i32, %arg2: memref<2xf32, #tpu.memory_space<smem>>) -> (i32, i32) {
    %c0_i32 = arith.constant 0 : i32
    %c0_i32_0 = arith.constant 0 : i32
    %c0_i32_1 = arith.constant 0 : i32
    return %c0_i32, %c0_i32_0 : i32, i32
  }
  func.func @transform_11(%arg0: i32, %arg1: i32, %arg2: memref<2xf32, #tpu.memory_space<smem>>) -> (i32, i32) {
    %c0_i32 = arith.constant 0 : i32
    %c0_i32_0 = arith.constant 0 : i32
    %c0_i32_1 = arith.constant 0 : i32
    return %c0_i32, %c0_i32_0 : i32, i32
  }
  func.func @transform_12(%arg0: i32, %arg1: i32, %arg2: memref<2xf32, #tpu.memory_space<smem>>) -> (i32, i32, i32) {
    %c0_i32 = arith.constant 0 : i32
    %c0_i32_0 = arith.constant 0 : i32
    return %arg0, %arg1, %c0_i32 : i32, i32, i32
  }
}

</mosaic_0001>

<llo_original>
// kernel: tpu_custom_call.1
$region0: #{tpu_custom_call.1}
  #allocation0 [shape = 'u32[]', space=smem, size = 0x4, offset = 0x4, fixed_abs, tag = 'smem constant byte address 0x4 - core index']
  #allocation1 [shape = 'u32[144,128]{1,0:T(1,128)}', space=vmem, size = 0x12000, scoped, tag = 'internal scratch']
  #allocation2 [shape = 's32[1]{0}', space=sflag, size = 0x4, scoped, tag = 'scoped memory for tpu_custom_call.1']
  #allocation3 [shape = 'u8[512]{0}', space=smem, size = 0x200, scoped, tag = 'prefetched SMEM operand 0']
  %s0 = inlined_call_operand.vmem [shape: f32[2], index: 0, kind: input, shape index: {}]
  %s1 = inlined_call_operand.vmem [shape: f32[2,8,32], index: 1, kind: input, shape index: {}]
  %s2 = inlined_call_operand.vmem [shape: f32[2,16,32], index: 2, kind: input, shape index: {}]
  %s3 = inlined_call_operand.vmem [shape: f32[2,16,1], index: 3, kind: input, shape index: {}]
  %s4 = inlined_call_operand.vmem [shape: f32[2,8,1], index: 4, kind: input, shape index: {}]
  %s5 = inlined_call_operand.vmem [shape: f32[32,32], index: 5, kind: input, shape index: {}]
  %s6 = inlined_call_operand.vmem [shape: f32[1,32], index: 6, kind: input, shape index: {}]
  %s7 = inlined_call_operand.vmem [shape: f32[32,16], index: 7, kind: input, shape index: {}]
  %s8 = inlined_call_operand.vmem [shape: f32[1,16], index: 8, kind: input, shape index: {}]
  %s9 = inlined_call_operand.vmem [shape: f32[32,16], index: 9, kind: input, shape index: {}]
  %s10 = inlined_call_operand.vmem [shape: f32[1,16], index: 10, kind: input, shape index: {}]
  %s11 = inlined_call_operand.vmem [shape: f32[32,32], index: 11, kind: input, shape index: {}]
  %s12 = inlined_call_operand.vmem [shape: f32[1,32], index: 12, kind: input, shape index: {}]
  %s13 = inlined_call_operand.hbm [shape: f32[2,8,32], index: 13, kind: output, shape index: {}]
  %s14 = sld [smem:[#allocation0]]
  $region81: #{tpu_custom_call.1} parent=0
    _
  %s16 = ssub.s32 1, %s14
  %s17 = scalar_select 0, %s16, %s14
  %s18 = sshll.u32 %s0, 4
  %s19 = int_to_ptr.vmem [resolvable:$true] %s18
  %21 = dma.vmem_to_smem %s19, 16, [#allocation3], [#allocation2]
  %22 = dma.done [#allocation2], 16
  %23 = sfence
  $region1: #{tpu_custom_call.1} parent=0
    #allocation4 [shape = 'u8[8192]{0}', space=vmem, size = 0x2000, scoped, tag = 'output window, operand 0']
    #allocation5 [shape = 's32[2]{0}', space=sflag, size = 0x8, scoped, tag = 'scoped memory for tpu_custom_call.1']
    %24 = vsyncpa [#allocation5], 0
    %s25 = scalar_lea.sflag [#allocation5], 1
    %26 = vsyncpa %s25, 0
    loop: start=0, step=1, limit=4
    $region2: #{tpu_custom_call.1} parent=1 // loop_pre_header
      _
    $region3: #{tpu_custom_call.1} parent=1 // loop_header
      %s28 = sphi 0, %s32
      %p29 = scmp.ge.s32.totalorder %s28, 4
      %s35 = sphi 0, %s47
      %s36 = sphi 0, %s43
      %s37 = sphi 0, %s35
      %s38 = sphi 0, %s36
      %s39 = sphi 0, %s37
      %s40 = sphi 0, %s38
      %s52 = sphi 0, %s54
      %s55 = sphi 0, %s52
      %s56 = sphi 0, %s55
      %s72 = sphi 0, %s56
      %s78 = sphi 0, %s80
      %s81 = sphi 0, %s78
      %s82 = sphi 0, %s81
      %s98 = sphi 0, %s82
      %s104 = sphi 0, %s106
      %s107 = sphi 0, %s104
      %s108 = sphi 0, %s107
      %s124 = sphi 0, %s108
      %s132 = sphi 0, %s134
      %s135 = sphi 0, %s132
      %s136 = sphi 0, %s135
      %s152 = sphi 0, %s136
      %s156 = sphi 0, %s156
      %s158 = sphi 0, %s156
      %s159 = sphi 0, %s158
      %s173 = sphi 0, %s159
      %s177 = sphi 0, %s177
      %s179 = sphi 0, %s177
      %s180 = sphi 0, %s179
      %s194 = sphi 0, %s180
      %s198 = sphi 0, %s198
      %s200 = sphi 0, %s198
      %s201 = sphi 0, %s200
      %s215 = sphi 0, %s201
      %s219 = sphi 0, %s219
      %s221 = sphi 0, %s219
      %s222 = sphi 0, %s221
      %s236 = sphi 0, %s222
      %s240 = sphi 0, %s240
      %s242 = sphi 0, %s240
      %s243 = sphi 0, %s242
      %s257 = sphi 0, %s243
      %s261 = sphi 0, %s261
      %s263 = sphi 0, %s261
      %s264 = sphi 0, %s263
      %s278 = sphi 0, %s264
      %s282 = sphi 0, %s282
      %s284 = sphi 0, %s282
      %s285 = sphi 0, %s284
      %s299 = sphi 0, %s285
      %s303 = sphi 0, %s303
      %s305 = sphi 0, %s303
      %s306 = sphi 0, %s305
      %s320 = sphi 0, %s306
      %s328 = sphi 0, %s330
      %s331 = sphi 0, %s328
      %s332 = sphi 0, %s331
      %s348 = sphi 0, %s332
    $region4: #{tpu_custom_call.1} parent=1 // loop_header_branch
      %31 = sbr.rel (%p29) target = $region8
    $region5: #{tpu_custom_call.1} parent=1 // loop_body
      %s33 = ssub.s32 %s28, 1
      %s34 = ssub.s32 %s28, 2
      %s41 = sadd.s32 1, %s36
      %p42 = scmp.ge.s32.totalorder %s41, 1
      %s43 = scalar_select %p42, 0, %s41
      %s44 = sadd.s32 1, %s35
      %s45 = scalar_select %p42, %s44, %s35
      %p46 = scmp.ge.s32.totalorder %s45, 2
      %s47 = scalar_select %p46, 0, %s45
      %s48 = ssub.s32 %s35, %s47
      %s49 = ssub.s32 %s36, %s43
      %s50 = sor.u32 %s48, %s49
      %p51 = scmp.eq.s32.totalorder %s50, 0
      %s53 = sadd.s32 %s52, 1
      %s54 = scalar_select %p51, %s52, %s53
      %p57 = pneg %p51
      %p58 = scmp.eq.s32.totalorder %s28, 1
      %p59 = por %p57, %p58
      %p60 = scmp.ne.s32.totalorder %s52, %s55
      %p61 = scmp.eq.s32.totalorder %s28, 0
      %p62 = por %p60, %p61
      %p63 = scmp.ne.s32.totalorder %s52, %s55
      %p64 = scmp.eq.s32.totalorder %s33, 1
      %p65 = por %p63, %p64
      %p66 = scmp.ne.s32.totalorder %s55, %s56
      %p67 = scmp.eq.s32.totalorder %s33, 0
      %p68 = por %p66, %p67
      %p69 = scmp.ne.s32.totalorder %s55, %s56
      %p70 = scmp.eq.s32.totalorder %s34, 1
      %p71 = por %p69, %p70
      %p73 = scmp.ne.s32.totalorder %s56, %s72
      %p74 = scmp.eq.s32.totalorder %s34, 0
      %p75 = por %p73, %p74
      %s76 = ssub.s32 %s35, %s47
      %p77 = scmp.eq.s32.totalorder %s76, 0
      %s79 = sadd.s32 %s78, 1
      %s80 = scalar_select %p77, %s78, %s79
      %p83 = pneg %p77
      %p84 = scmp.eq.s32.totalorder %s28, 1
      %p85 = por %p83, %p84
      %p86 = scmp.ne.s32.totalorder %s78, %s81
      %p87 = scmp.eq.s32.totalorder %s28, 0
      %p88 = por %p86, %p87
      %p89 = scmp.ne.s32.totalorder %s78, %s81
      %p90 = scmp.eq.s32.totalorder %s33, 1
      %p91 = por %p89, %p90
      %p92 = scmp.ne.s32.totalorder %s81, %s82
      %p93 = scmp.eq.s32.totalorder %s33, 0
      %p94 = por %p92, %p93
      %p95 = scmp.ne.s32.totalorder %s81, %s82
      %p96 = scmp.eq.s32.totalorder %s34, 1
      %p97 = por %p95, %p96
      %p99 = scmp.ne.s32.totalorder %s82, %s98
      %p100 = scmp.eq.s32.totalorder %s34, 0
      %p101 = por %p99, %p100
      %s102 = ssub.s32 %s35, %s47
      %p103 = scmp.eq.s32.totalorder %s102, 0
      %s105 = sadd.s32 %s104, 1
      %s106 = scalar_select %p103, %s104, %s105
      %p109 = pneg %p103
      %p110 = scmp.eq.s32.totalorder %s28, 1
      %p111 = por %p109, %p110
      %p112 = scmp.ne.s32.totalorder %s104, %s107
      %p113 = scmp.eq.s32.totalorder %s28, 0
      %p114 = por %p112, %p113
      %p115 = scmp.ne.s32.totalorder %s104, %s107
      %p116 = scmp.eq.s32.totalorder %s33, 1
      %p117 = por %p115, %p116
      %p118 = scmp.ne.s32.totalorder %s107, %s108
      %p119 = scmp.eq.s32.totalorder %s33, 0
      %p120 = por %p118, %p119
      %p121 = scmp.ne.s32.totalorder %s107, %s108
      %p122 = scmp.eq.s32.totalorder %s34, 1
      %p123 = por %p121, %p122
      %p125 = scmp.ne.s32.totalorder %s108, %s124
      %p126 = scmp.eq.s32.totalorder %s34, 0
      %p127 = por %p125, %p126
      %s128 = ssub.s32 %s35, %s47
      %s129 = ssub.s32 %s36, %s43
      %s130 = sor.u32 %s128, %s129
      %p131 = scmp.eq.s32.totalorder %s130, 0
      %s133 = sadd.s32 %s132, 1
      %s134 = scalar_select %p131, %s132, %s133
      %p137 = pneg %p131
      %p138 = scmp.eq.s32.totalorder %s28, 1
      %p139 = por %p137, %p138
      %p140 = scmp.ne.s32.totalorder %s132, %s135
      %p141 = scmp.eq.s32.totalorder %s28, 0
      %p142 = por %p140, %p141
      %p143 = scmp.ne.s32.totalorder %s132, %s135
      %p144 = scmp.eq.s32.totalorder %s33, 1
      %p145 = por %p143, %p144
      %p146 = scmp.ne.s32.totalorder %s135, %s136
      %p147 = scmp.eq.s32.totalorder %s33, 0
      %p148 = por %p146, %p147
      %p149 = scmp.ne.s32.totalorder %s135, %s136
      %p150 = scmp.eq.s32.totalorder %s34, 1
      %p151 = por %p149, %p150
      %p153 = scmp.ne.s32.totalorder %s136, %s152
      %p154 = scmp.eq.s32.totalorder %s34, 0
      %p155 = por %p153, %p154
      %s157 = sadd.s32 %s156, 1
      %p160 = scmp.eq.s32.totalorder %s28, 1
      %p161 = scmp.ne.s32.totalorder %s156, %s158
      %p162 = scmp.eq.s32.totalorder %s28, 0
      %p163 = por %p161, %p162
      %p164 = scmp.ne.s32.totalorder %s156, %s158
      %p165 = scmp.eq.s32.totalorder %s33, 1
      %p166 = por %p164, %p165
      %p167 = scmp.ne.s32.totalorder %s158, %s159
      %p168 = scmp.eq.s32.totalorder %s33, 0
      %p169 = por %p167, %p168
      %p170 = scmp.ne.s32.totalorder %s158, %s159
      %p171 = scmp.eq.s32.totalorder %s34, 1
      %p172 = por %p170, %p171
      %p174 = scmp.ne.s32.totalorder %s159, %s173
      %p175 = scmp.eq.s32.totalorder %s34, 0
      %p176 = por %p174, %p175
      %s178 = sadd.s32 %s177, 1
      %p181 = scmp.eq.s32.totalorder %s28, 1
      %p182 = scmp.ne.s32.totalorder %s177, %s179
      %p183 = scmp.eq.s32.totalorder %s28, 0
      %p184 = por %p182, %p183
      %p185 = scmp.ne.s32.totalorder %s177, %s179
      %p186 = scmp.eq.s32.totalorder %s33, 1
      %p187 = por %p185, %p186
      %p188 = scmp.ne.s32.totalorder %s179, %s180
      %p189 = scmp.eq.s32.totalorder %s33, 0
      %p190 = por %p188, %p189
      %p191 = scmp.ne.s32.totalorder %s179, %s180
      %p192 = scmp.eq.s32.totalorder %s34, 1
      %p193 = por %p191, %p192
      %p195 = scmp.ne.s32.totalorder %s180, %s194
      %p196 = scmp.eq.s32.totalorder %s34, 0
      %p197 = por %p195, %p196
      %s199 = sadd.s32 %s198, 1
      %p202 = scmp.eq.s32.totalorder %s28, 1
      %p203 = scmp.ne.s32.totalorder %s198, %s200
      %p204 = scmp.eq.s32.totalorder %s28, 0
      %p205 = por %p203, %p204
      %p206 = scmp.ne.s32.totalorder %s198, %s200
      %p207 = scmp.eq.s32.totalorder %s33, 1
      %p208 = por %p206, %p207
      %p209 = scmp.ne.s32.totalorder %s200, %s201
      %p210 = scmp.eq.s32.totalorder %s33, 0
      %p211 = por %p209, %p210
      %p212 = scmp.ne.s32.totalorder %s200, %s201
      %p213 = scmp.eq.s32.totalorder %s34, 1
      %p214 = por %p212, %p213
      %p216 = scmp.ne.s32.totalorder %s201, %s215
      %p217 = scmp.eq.s32.totalorder %s34, 0
      %p218 = por %p216, %p217
      %s220 = sadd.s32 %s219, 1
      %p223 = scmp.eq.s32.totalorder %s28, 1
      %p224 = scmp.ne.s32.totalorder %s219, %s221
      %p225 = scmp.eq.s32.totalorder %s28, 0
      %p226 = por %p224, %p225
      %p227 = scmp.ne.s32.totalorder %s219, %s221
      %p228 = scmp.eq.s32.totalorder %s33, 1
      %p229 = por %p227, %p228
      %p230 = scmp.ne.s32.totalorder %s221, %s222
      %p231 = scmp.eq.s32.totalorder %s33, 0
      %p232 = por %p230, %p231
      %p233 = scmp.ne.s32.totalorder %s221, %s222
      %p234 = scmp.eq.s32.totalorder %s34, 1
      %p235 = por %p233, %p234
      %p237 = scmp.ne.s32.totalorder %s222, %s236
      %p238 = scmp.eq.s32.totalorder %s34, 0
      %p239 = por %p237, %p238
      %s241 = sadd.s32 %s240, 1
      %p244 = scmp.eq.s32.totalorder %s28, 1
      %p245 = scmp.ne.s32.totalorder %s240, %s242
      %p246 = scmp.eq.s32.totalorder %s28, 0
      %p247 = por %p245, %p246
      %p248 = scmp.ne.s32.totalorder %s240, %s242
      %p249 = scmp.eq.s32.totalorder %s33, 1
      %p250 = por %p248, %p249
      %p251 = scmp.ne.s32.totalorder %s242, %s243
      %p252 = scmp.eq.s32.totalorder %s33, 0
      %p253 = por %p251, %p252
      %p254 = scmp.ne.s32.totalorder %s242, %s243
      %p255 = scmp.eq.s32.totalorder %s34, 1
      %p256 = por %p254, %p255
      %p258 = scmp.ne.s32.totalorder %s243, %s257
      %p259 = scmp.eq.s32.totalorder %s34, 0
      %p260 = por %p258, %p259
      %s262 = sadd.s32 %s261, 1
      %p265 = scmp.eq.s32.totalorder %s28, 1
      %p266 = scmp.ne.s32.totalorder %s261, %s263
      %p267 = scmp.eq.s32.totalorder %s28, 0
      %p268 = por %p266, %p267
      %p269 = scmp.ne.s32.totalorder %s261, %s263
      %p270 = scmp.eq.s32.totalorder %s33, 1
      %p271 = por %p269, %p270
      %p272 = scmp.ne.s32.totalorder %s263, %s264
      %p273 = scmp.eq.s32.totalorder %s33, 0
      %p274 = por %p272, %p273
      %p275 = scmp.ne.s32.totalorder %s263, %s264
      %p276 = scmp.eq.s32.totalorder %s34, 1
      %p277 = por %p275, %p276
      %p279 = scmp.ne.s32.totalorder %s264, %s278
      %p280 = scmp.eq.s32.totalorder %s34, 0
      %p281 = por %p279, %p280
      %s283 = sadd.s32 %s282, 1
      %p286 = scmp.eq.s32.totalorder %s28, 1
      %p287 = scmp.ne.s32.totalorder %s282, %s284
      %p288 = scmp.eq.s32.totalorder %s28, 0
      %p289 = por %p287, %p288
      %p290 = scmp.ne.s32.totalorder %s282, %s284
      %p291 = scmp.eq.s32.totalorder %s33, 1
      %p292 = por %p290, %p291
      %p293 = scmp.ne.s32.totalorder %s284, %s285
      %p294 = scmp.eq.s32.totalorder %s33, 0
      %p295 = por %p293, %p294
      %p296 = scmp.ne.s32.totalorder %s284, %s285
      %p297 = scmp.eq.s32.totalorder %s34, 1
      %p298 = por %p296, %p297
      %p300 = scmp.ne.s32.totalorder %s285, %s299
      %p301 = scmp.eq.s32.totalorder %s34, 0
      %p302 = por %p300, %p301
      %s304 = sadd.s32 %s303, 1
      %p307 = scmp.eq.s32.totalorder %s28, 1
      %p308 = scmp.ne.s32.totalorder %s303, %s305
      %p309 = scmp.eq.s32.totalorder %s28, 0
      %p310 = por %p308, %p309
      %p311 = scmp.ne.s32.totalorder %s303, %s305
      %p312 = scmp.eq.s32.totalorder %s33, 1
      %p313 = por %p311, %p312
      %p314 = scmp.ne.s32.totalorder %s305, %s306
      %p315 = scmp.eq.s32.totalorder %s33, 0
      %p316 = por %p314, %p315
      %p317 = scmp.ne.s32.totalorder %s305, %s306
      %p318 = scmp.eq.s32.totalorder %s34, 1
      %p319 = por %p317, %p318
      %p321 = scmp.ne.s32.totalorder %s306, %s320
      %p322 = scmp.eq.s32.totalorder %s34, 0
      %p323 = por %p321, %p322
      %s324 = ssub.s32 %s35, %s47
      %s325 = ssub.s32 %s36, %s43
      %s326 = sor.u32 %s324, %s325
      %p327 = scmp.eq.s32.totalorder %s326, 0
      %s329 = sadd.s32 %s328, 1
      %s330 = scalar_select %p327, %s328, %s329
      %p333 = pneg %p327
      %p334 = scmp.eq.s32.totalorder %s28, 1
      %p335 = por %p333, %p334
      %p336 = scmp.ne.s32.totalorder %s328, %s331
      %p337 = scmp.eq.s32.totalorder %s28, 0
      %p338 = por %p336, %p337
      %p339 = scmp.ne.s32.totalorder %s328, %s331
      %p340 = scmp.eq.s32.totalorder %s33, 1
      %p341 = por %p339, %p340
      %p342 = scmp.ne.s32.totalorder %s331, %s332
      %p343 = scmp.eq.s32.totalorder %s33, 0
      %p344 = por %p342, %p343
      %p345 = scmp.ne.s32.totalorder %s331, %s332
      %p346 = scmp.eq.s32.totalorder %s34, 1
      %p347 = por %p345, %p346
      %p349 = scmp.ne.s32.totalorder %s332, %s348
      %p350 = scmp.eq.s32.totalorder %s34, 0
      %p351 = por %p349, %p350
      %p352 = scmp.le.s32.totalorder 1, %s28
      %p353 = scmp.lt.s32.totalorder %s28, 3
      %p354 = pnand %p352, %p353
      %p355 = pneg %p354
      // Predicated region
      $region9: #{tpu_custom_call.1} parent=5 // pred_check
        _
      $region10: #{tpu_custom_call.1} parent=5 // pred_check_branch
        %357 = sbr.rel (%p354) target = $region12
      $region11: #{tpu_custom_call.1} parent=5 // pred_region
        %s358 = ssub.s32 %s28, 1
        // Predicated region
        $region13: #{tpu_custom_call.1} parent=11 // pred_check
          %p359 = pneg %p169
        $region14: #{tpu_custom_call.1} parent=11 // pred_check_branch
          %361 = sbr.rel (%p359) target = $region16
        $region15: #{tpu_custom_call.1} parent=11 // pred_region
          _
        $region16: #{tpu_custom_call.1} parent=11 // pred_fallthru
          _
        // Predicated region
        $region17: #{tpu_custom_call.1} parent=11 // pred_check
          %p362 = pneg %p190
        $region18: #{tpu_custom_call.1} parent=11 // pred_check_branch
          %364 = sbr.rel (%p362) target = $region20
        $region19: #{tpu_custom_call.1} parent=11 // pred_region
          _
        $region20: #{tpu_custom_call.1} parent=11 // pred_fallthru
          _
        // Predicated region
        $region21: #{tpu_custom_call.1} parent=11 // pred_check
          %p365 = pneg %p211
        $region22: #{tpu_custom_call.1} parent=11 // pred_check_branch
          %367 = sbr.rel (%p365) target = $region24
        $region23: #{tpu_custom_call.1} parent=11 // pred_region
          _
        $region24: #{tpu_custom_call.1} parent=11 // pred_fallthru
          _
        // Predicated region
        $region25: #{tpu_custom_call.1} parent=11 // pred_check
          %p368 = pneg %p232
        $region26: #{tpu_custom_call.1} parent=11 // pred_check_branch
          %370 = sbr.rel (%p368) target = $region28
        $region27: #{tpu_custom_call.1} parent=11 // pred_region
          _
        $region28: #{tpu_custom_call.1} parent=11 // pred_fallthru
          _
        // Predicated region
        $region29: #{tpu_custom_call.1} parent=11 // pred_check
          %p371 = pneg %p253
        $region30: #{tpu_custom_call.1} parent=11 // pred_check_branch
          %373 = sbr.rel (%p371) target = $region32
        $region31: #{tpu_custom_call.1} parent=11 // pred_region
          _
        $region32: #{tpu_custom_call.1} parent=11 // pred_fallthru
          _
        // Predicated region
        $region33: #{tpu_custom_call.1} parent=11 // pred_check
          %p374 = pneg %p274
        $region34: #{tpu_custom_call.1} parent=11 // pred_check_branch
          %376 = sbr.rel (%p374) target = $region36
        $region35: #{tpu_custom_call.1} parent=11 // pred_region
          _
        $region36: #{tpu_custom_call.1} parent=11 // pred_fallthru
          _
        // Predicated region
        $region37: #{tpu_custom_call.1} parent=11 // pred_check
          %p377 = pneg %p295
        $region38: #{tpu_custom_call.1} parent=11 // pred_check_branch
          %379 = sbr.rel (%p377) target = $region40
        $region39: #{tpu_custom_call.1} parent=11 // pred_region
          _
        $region40: #{tpu_custom_call.1} parent=11 // pred_fallthru
          _
        // Predicated region
        $region41: #{tpu_custom_call.1} parent=11 // pred_check
          %p380 = pneg %p316
        $region42: #{tpu_custom_call.1} parent=11 // pred_check_branch
          %382 = sbr.rel (%p380) target = $region44
        $region43: #{tpu_custom_call.1} parent=11 // pred_region
          _
        $region44: #{tpu_custom_call.1} parent=11 // pred_fallthru
          _
      $region12: #{tpu_custom_call.1} parent=5 // pred_fallthru
        _
      %p383 = scmp.lt.s32.totalorder %s28, 2
      // Predicated region
      $region45: #{tpu_custom_call.1} parent=5 // pred_check
        %p384 = pneg %p383
      $region46: #{tpu_custom_call.1} parent=5 // pred_check_branch
        %386 = sbr.rel (%p384) target = $region48
      $region47: #{tpu_custom_call.1} parent=5 // pred_region
        // Predicated region
        $region49: #{tpu_custom_call.1} parent=47 // pred_check
          %p387 = pneg %p62
        $region50: #{tpu_custom_call.1} parent=47 // pred_check_branch
          %389 = sbr.rel (%p387) target = $region52
        $region51: #{tpu_custom_call.1} parent=47 // pred_region
          %p390 = scmp.lt.s32.totalorder %s35, 1
          %s391 = scalar_select %p390, %s35, 1
          %p392 = scmp.lt.s32.totalorder %s36, 0
          %s393 = scalar_select %p392, %s36, 0
          %s394 = sadd.s32 %s393, %s391
          %s395 = smul.addr %s394, 8
          %s396 = scalar_lea.vmem %s1, %s395
        $region52: #{tpu_custom_call.1} parent=47 // pred_fallthru
          _
        // Predicated region
        $region53: #{tpu_custom_call.1} parent=47 // pred_check
          %p397 = pneg %p88
        $region54: #{tpu_custom_call.1} parent=47 // pred_check_branch
          %399 = sbr.rel (%p397) target = $region56
        $region55: #{tpu_custom_call.1} parent=47 // pred_region
          %p400 = scmp.lt.s32.totalorder %s35, 1
          %s401 = scalar_select %p400, %s35, 1
          %s402 = smul.addr %s401, 2
          %s403 = smul.addr %s402, 8
          %s404 = scalar_lea.vmem %s2, %s403
        $region56: #{tpu_custom_call.1} parent=47 // pred_fallthru
          _
        // Predicated region
        $region57: #{tpu_custom_call.1} parent=47 // pred_check
          %p405 = pneg %p114
        $region58: #{tpu_custom_call.1} parent=47 // pred_check_branch
          %407 = sbr.rel (%p405) target = $region60
        $region59: #{tpu_custom_call.1} parent=47 // pred_region
          %p408 = scmp.lt.s32.totalorder %s35, 1
          %s409 = scalar_select %p408, %s35, 1
          %s410 = smul.addr %s409, 2
          %s411 = smul.addr %s410, 8
          %s412 = scalar_lea.vmem %s3, %s411
        $region60: #{tpu_custom_call.1} parent=47 // pred_fallthru
          _
        // Predicated region
        $region61: #{tpu_custom_call.1} parent=47 // pred_check
          %p413 = pneg %p142
        $region62: #{tpu_custom_call.1} parent=47 // pred_check_branch
          %415 = sbr.rel (%p413) target = $region64
        $region63: #{tpu_custom_call.1} parent=47 // pred_region
          %p416 = scmp.lt.s32.totalorder %s35, 1
          %s417 = scalar_select %p416, %s35, 1
          %p418 = scmp.lt.s32.totalorder %s36, 0
          %s419 = scalar_select %p418, %s36, 0
          %s420 = sadd.s32 %s419, %s417
          %s421 = smul.addr %s420, 8
          %s422 = scalar_lea.vmem %s4, %s421
        $region64: #{tpu_custom_call.1} parent=47 // pred_fallthru
          _
      $region48: #{tpu_custom_call.1} parent=5 // pred_fallthru
        _
      %p423 = scmp.le.s32.totalorder 1, %s28
      %p424 = scmp.lt.s32.totalorder %s28, 3
      %p425 = pnand %p423, %p424
      %p426 = pneg %p425
      // Predicated region
      $region65: #{tpu_custom_call.1} parent=5 // pred_check
        _
      $region66: #{tpu_custom_call.1} parent=5 // pred_check_branch
        %428 = sbr.rel (%p425) target = $region68
      $region67: #{tpu_custom_call.1} parent=5 // pred_region
        %s429 = ssub.s32 %s28, 1
        %p430 = scmp.lt.s32.totalorder %s37, 1
        %s431 = scalar_select %p430, %s37, 1
        %p432 = scmp.lt.s32.totalorder %s38, 0
        %s433 = scalar_select %p432, %s38, 0
        %s434 = sadd.s32 %s433, %s431
        %s435 = smul.addr %s434, 8
        %s436 = scalar_lea.vmem %s1, %s435
        %p437 = pneg %p68
        %p438 = pneg %p65
        %p439 = scmp.lt.s32.totalorder %s37, 1
        %s440 = scalar_select %p439, %s37, 1
        %s441 = smul.addr %s440, 2
        %s442 = smul.addr %s441, 8
        %s443 = scalar_lea.vmem %s2, %s442
        %p444 = pneg %p94
        %p445 = pneg %p91
        %p446 = scmp.lt.s32.totalorder %s37, 1
        %s447 = scalar_select %p446, %s37, 1
        %s448 = smul.addr %s447, 2
        %s449 = smul.addr %s448, 8
        %s450 = scalar_lea.vmem %s3, %s449
        %p451 = pneg %p120
        %p452 = pneg %p117
        %p453 = scmp.lt.s32.totalorder %s37, 1
        %s454 = scalar_select %p453, %s37, 1
        %p455 = scmp.lt.s32.totalorder %s38, 0
        %s456 = scalar_select %p455, %s38, 0
        %s457 = sadd.s32 %s456, %s454
        %s458 = smul.addr %s457, 8
        %s459 = scalar_lea.vmem %s4, %s458
        %p460 = pneg %p148
        %p461 = pneg %p145
        %p462 = pneg %p169
        %p463 = pneg %p166
        %p464 = pneg %p190
        %p465 = pneg %p187
        %p466 = pneg %p211
        %p467 = pneg %p208
        %p468 = pneg %p232
        %p469 = pneg %p229
        %p470 = pneg %p253
        %p471 = pneg %p250
        %p472 = pneg %p274
        %p473 = pneg %p271
        %p474 = pneg %p295
        %p475 = pneg %p292
        %p476 = pneg %p316
        %p477 = pneg %p313
        %p478 = pneg %p344
        %p479 = pneg %p341
        %s480 = sand.u32 %s331, 1
        %s481 = scalar_lea.sflag [#allocation5], %s480
        %s482 = sand.u32 %s331, 1
        %s483 = smul.addr %s482, 8
        %s484 = scalar_lea.vmem [#allocation4], %s483
        %p485 = scmp.lt.s32.totalorder %s37, 1
        %s486 = scalar_select %p485, %s37, 1
        %p487 = scmp.lt.s32.totalorder %s38, 0
        %s488 = scalar_select %p487, %s38, 0
        %s489 = sadd.s32 %s488, %s486
        %s490 = smul.addr %s489, 8
        %s491 = scalar_lea.vmem %s1, %s490
        %p492 = scmp.lt.s32.totalorder %s37, 1
        %s493 = scalar_select %p492, %s37, 1
        %s494 = smul.addr %s493, 2
        %s495 = smul.addr %s494, 8
        %s496 = scalar_lea.vmem %s2, %s495
        %p497 = scmp.lt.s32.totalorder %s37, 1
        %s498 = scalar_select %p497, %s37, 1
        %s499 = smul.addr %s498, 2
        %s500 = smul.addr %s499, 8
        %s501 = scalar_lea.vmem %s3, %s500
        %p502 = scmp.lt.s32.totalorder %s37, 1
        %s503 = scalar_select %p502, %s37, 1
        %p504 = scmp.lt.s32.totalorder %s38, 0
        %s505 = scalar_select %p504, %s38, 0
        %s506 = sadd.s32 %s505, %s503
        %s507 = smul.addr %s506, 8
        %s508 = scalar_lea.vmem %s4, %s507
        %v510 = vld [vmem:[%s491] sm:$0xff]
        %v511 = vld [vmem:[%s496] sm:$0xff]
        %v512 = vld [vmem:[%s496 + $0x8] sm:$0xff]
        %v513 = vld [vmem:[%s501] sm:$0xff]
        %v514 = vld [vmem:[%s501 + $0x8] sm:$0xff]
        %v515 = vld [vmem:[%s508] sm:$0xff]
        %v516 = vpack.c.bf16 %v512, %v511
        %v517 = vld [vmem:[%s5] sm:$0xff]
        %v518 = vld [vmem:[%s5 + $0x8] sm:$0xff]
        %v519 = vld [vmem:[%s5 + $0x10] sm:$0xff]
        %v520 = vld [vmem:[%s5 + $0x18] sm:$0xff]
        %v521 = vpack.c.bf16 %v518, %v517
        %v522 = vpack.c.bf16 %v520, %v519
        %v523 = vld [vmem:[%s6] sm:$0x1]
        %v525 = vlaneseq
        %v526 = vshrl.u32 %v525, 7
        %v527 = vsub.s32 0, %v526
        %v528 = vrot.slane %v523, %v527
        %vm530 = vcmask 261120
        %v532 = vsel %vm530, %v516, 0
        %534 = vmatprep.subr.bf16.mxu0 0
        %535 = vmatpush1.bf16.msra.mxu0 0
        %536 = vmatprep.subr.bf16.mxu0 0
        %537 = vmatpush1.bf16.msra.mxu0 0
        %538 = vmatprep.subr.bf16.mxu0 0
        %539 = vmatpush1.bf16.msra.mxu0 0
        %540 = vmatprep.subr.bf16.mxu0 0
        %541 = vmatpush1.bf16.msra.mxu0 0
        %542 = vmatprep.subr.bf16.mxu0 0
        %543 = vmatpush1.bf16.msra.mxu0 0
        %544 = vmatprep.subr.bf16.mxu0 0
        %545 = vmatpush1.bf16.msra.mxu0 0
        %546 = vmatprep.subr.bf16.mxu0 0
        %547 = vmatpush1.bf16.msra.mxu0 %v522
        %548 = vmatprep.subr.bf16.mxu0 0
        %549 = vmatpush1.bf16.msra.mxu0 %v521
        %550 = vmatprep.subr.bf16.mxu0 0
        %551 = vmatpush2.bf16.msra.mxu0 0
        %552 = vmatprep.subr.bf16.mxu0 0
        %553 = vmatpush2.bf16.msra.mxu0 0
        %554 = vmatprep.subr.bf16.mxu0 0
        %555 = vmatpush2.bf16.msra.mxu0 0
        %556 = vmatprep.subr.bf16.mxu0 0
        %557 = vmatpush2.bf16.msra.mxu0 0
        %558 = vmatprep.subr.bf16.mxu0 0
        %559 = vmatpush2.bf16.msra.mxu0 0
        %560 = vmatprep.subr.bf16.mxu0 0
        %561 = vmatpush2.bf16.msra.mxu0 0
        %562 = vmatprep.subr.bf16.mxu0 0
        %563 = vmatpush2.bf16.msra.mxu0 0
        %564 = vmatprep.subr.bf16.mxu0 0
        %565 = vmatpush2.bf16.msra.mxu0 0
        %566 = vmatprep.mubr.bf16.mxu0 0
        %567 = vmatmul.mubr.bf16.gmra.mxu0 %v532
        %v568 = vpop.f32.mrf.mxu0
        %v569 = vadd.f32 %v528, %v568
        %v570 = vpop.f32.mrf.mxu0
        %v571 = vpop.f32.mrf.mxu0
        %v572 = vadd.f32 %v528, %v571
        %v573 = vpop.f32.mrf.mxu0
        %574 = vdwg.mxu0
        %576 = vset.pattern.permute.xlu0 0
        %577 = vperm.xlu0 %576, %v513
        %v578 = vpop.permute.xlu0 %577
        %581 = vset.pattern.permute.xlu0 0
        %582 = vperm.xlu0 %581, %v514
        %v583 = vpop.permute.xlu0 %582
        %v585 = vmul.f32 %v569, %v578
        %v586 = vmul.f32 %v572, %v583
        %v587 = vld [vmem:[%s7] sm:$0xff]
        %v588 = vld [vmem:[%s7 + $0x8] sm:$0xff]
        %v589 = vld [vmem:[%s7 + $0x10] sm:$0xff]
        %v590 = vld [vmem:[%s7 + $0x18] sm:$0xff]
        %v591 = vld [vmem:[%s8] sm:$0x1]
        %v593 = vlaneseq
        %v594 = vshrl.u32 %v593, 7
        %v595 = vsub.s32 0, %v594
        %v596 = vrot.slane %v591, %v595
        %v599 = vsel %vm530, %v510, 0
        %601 = vmatprep.subr.mxu0 0.0
        %602 = vmatpush1.msra.mxu0 0.0
        %603 = vmatprep.subr.mxu0 0.0
        %604 = vmatpush1.msra.mxu0 0.0
        %605 = vmatprep.subr.mxu0 0.0
        %606 = vmatpush1.msra.mxu0 0.0
        %607 = vmatprep.subr.mxu0 0.0
        %608 = vmatpush1.msra.mxu0 0.0
        %609 = vmatprep.subr.mxu0 0.0
        %610 = vmatpush1.msra.mxu0 0.0
        %611 = vmatprep.subr.mxu0 0.0
        %612 = vmatpush1.msra.mxu0 0.0
        %613 = vmatprep.subr.mxu0 0.0
        %614 = vmatpush1.msra.mxu0 0.0
        %615 = vmatprep.subr.mxu0 0.0
        %616 = vmatpush1.msra.mxu0 0.0
        %617 = vmatprep.subr.mxu0 0.0
        %618 = vmatpush1.msra.mxu0 0.0
        %619 = vmatprep.subr.mxu0 0.0
        %620 = vmatpush1.msra.mxu0 0.0
        %621 = vmatprep.subr.mxu0 0.0
        %622 = vmatpush1.msra.mxu0 0.0
        %623 = vmatprep.subr.mxu0 0.0
        %624 = vmatpush1.msra.mxu0 0.0
        %625 = vmatprep.subr.mxu0 0.0
        %626 = vmatpush1.msra.mxu0 %v590
        %627 = vmatprep.subr.mxu0 0.0
        %628 = vmatpush1.msra.mxu0 %v589
        %629 = vmatprep.subr.mxu0 0.0
        %630 = vmatpush1.msra.mxu0 %v588
        %631 = vmatprep.subr.mxu0 0.0
        %632 = vmatpush1.msra.mxu0 %v587
        %633 = vmatprep.subr.mxu0 0.0
        %634 = vmatpush2.msra.mxu0 0.0
        %635 = vmatprep.subr.mxu0 0.0
        %636 = vmatpush2.msra.mxu0 0.0
        %637 = vmatprep.subr.mxu0 0.0
        %638 = vmatpush2.msra.mxu0 0.0
        %639 = vmatprep.subr.mxu0 0.0
        %640 = vmatpush2.msra.mxu0 0.0
        %641 = vmatprep.subr.mxu0 0.0
        %642 = vmatpush2.msra.mxu0 0.0
        %643 = vmatprep.subr.mxu0 0.0
        %644 = vmatpush2.msra.mxu0 0.0
        %645 = vmatprep.subr.mxu0 0.0
        %646 = vmatpush2.msra.mxu0 0.0
        %647 = vmatprep.subr.mxu0 0.0
        %648 = vmatpush2.msra.mxu0 0.0
        %649 = vmatprep.subr.mxu0 0.0
        %650 = vmatpush2.msra.mxu0 0.0
        %651 = vmatprep.subr.mxu0 0.0
        %652 = vmatpush2.msra.mxu0 0.0
        %653 = vmatprep.subr.mxu0 0.0
        %654 = vmatpush2.msra.mxu0 0.0
        %655 = vmatprep.subr.mxu0 0.0
        %656 = vmatpush2.msra.mxu0 0.0
        %657 = vmatprep.subr.mxu0 0.0
        %658 = vmatpush2.msra.mxu0 0.0
        %659 = vmatprep.subr.mxu0 0.0
        %660 = vmatpush2.msra.mxu0 0.0
        %661 = vmatprep.subr.mxu0 0.0
        %662 = vmatpush2.msra.mxu0 0.0
        %663 = vmatprep.subr.mxu0 0.0
        %664 = vmatpush2.msra.mxu0 0.0
        %665 = vmatprep.mubr.f32.mxu0 0.0
        %666 = vmatmul.mubr.f32.gmra.mxu0 %v599
        %v667 = vpop.f32.mrf.mxu0
        %v668 = vadd.f32 %v596, %v667
        %v669 = vpop.f32.mrf.mxu0
        %670 = vdwg.mxu0
        %v671 = vld [vmem:[%s9] sm:$0xff]
        %v672 = vld [vmem:[%s9 + $0x8] sm:$0xff]
        %v673 = vld [vmem:[%s9 + $0x10] sm:$0xff]
        %v674 = vld [vmem:[%s9 + $0x18] sm:$0xff]
        %v675 = vld [vmem:[%s10] sm:$0x1]
        %v677 = vlaneseq
        %v678 = vshrl.u32 %v677, 7
        %v679 = vsub.s32 0, %v678
        %v680 = vrot.slane %v675, %v679
        %682 = vmatprep.subr.mxu0 0.0
        %683 = vmatpush1.msra.mxu0 0.0
        %684 = vmatprep.subr.mxu0 0.0
        %685 = vmatpush1.msra.mxu0 0.0
        %686 = vmatprep.subr.mxu0 0.0
        %687 = vmatpush1.msra.mxu0 0.0
        %688 = vmatprep.subr.mxu0 0.0
        %689 = vmatpush1.msra.mxu0 0.0
        %690 = vmatprep.subr.mxu0 0.0
        %691 = vmatpush1.msra.mxu0 0.0
        %692 = vmatprep.subr.mxu0 0.0
        %693 = vmatpush1.msra.mxu0 0.0
        %694 = vmatprep.subr.mxu0 0.0
        %695 = vmatpush1.msra.mxu0 0.0
        %696 = vmatprep.subr.mxu0 0.0
        %697 = vmatpush1.msra.mxu0 0.0
        %698 = vmatprep.subr.mxu0 0.0
        %699 = vmatpush1.msra.mxu0 0.0
        %700 = vmatprep.subr.mxu0 0.0
        %701 = vmatpush1.msra.mxu0 0.0
        %702 = vmatprep.subr.mxu0 0.0
        %703 = vmatpush1.msra.mxu0 0.0
        %704 = vmatprep.subr.mxu0 0.0
        %705 = vmatpush1.msra.mxu0 0.0
        %706 = vmatprep.subr.mxu0 0.0
        %707 = vmatpush1.msra.mxu0 %v674
        %708 = vmatprep.subr.mxu0 0.0
        %709 = vmatpush1.msra.mxu0 %v673
        %710 = vmatprep.subr.mxu0 0.0
        %711 = vmatpush1.msra.mxu0 %v672
        %712 = vmatprep.subr.mxu0 0.0
        %713 = vmatpush1.msra.mxu0 %v671
        %714 = vmatprep.subr.mxu0 0.0
        %715 = vmatpush2.msra.mxu0 0.0
        %716 = vmatprep.subr.mxu0 0.0
        %717 = vmatpush2.msra.mxu0 0.0
        %718 = vmatprep.subr.mxu0 0.0
        %719 = vmatpush2.msra.mxu0 0.0
        %720 = vmatprep.subr.mxu0 0.0
        %721 = vmatpush2.msra.mxu0 0.0
        %722 = vmatprep.subr.mxu0 0.0
        %723 = vmatpush2.msra.mxu0 0.0
        %724 = vmatprep.subr.mxu0 0.0
        %725 = vmatpush2.msra.mxu0 0.0
        %726 = vmatprep.subr.mxu0 0.0
        %727 = vmatpush2.msra.mxu0 0.0
        %728 = vmatprep.subr.mxu0 0.0
        %729 = vmatpush2.msra.mxu0 0.0
        %730 = vmatprep.subr.mxu0 0.0
        %731 = vmatpush2.msra.mxu0 0.0
        %732 = vmatprep.subr.mxu0 0.0
        %733 = vmatpush2.msra.mxu0 0.0
        %734 = vmatprep.subr.mxu0 0.0
        %735 = vmatpush2.msra.mxu0 0.0
        %736 = vmatprep.subr.mxu0 0.0
        %737 = vmatpush2.msra.mxu0 0.0
        %738 = vmatprep.subr.mxu0 0.0
        %739 = vmatpush2.msra.mxu0 0.0
        %740 = vmatprep.subr.mxu0 0.0
        %741 = vmatpush2.msra.mxu0 0.0
        %742 = vmatprep.subr.mxu0 0.0
        %743 = vmatpush2.msra.mxu0 0.0
        %744 = vmatprep.subr.mxu0 0.0
        %745 = vmatpush2.msra.mxu0 0.0
        %746 = vmatprep.mubr.f32.mxu0 0.0
        %747 = vmatmul.mubr.f32.gmra.mxu0 %v599
        %v748 = vpop.f32.mrf.mxu0
        %v749 = vadd.f32 %v680, %v748
        %v750 = vpop.f32.mrf.mxu0
        %751 = vdwg.mxu0
        %s752 = sld [smem:[#allocation3 + %s37]]
        %v753 = vstv %s752
        %v754 = vrcp.pop %v753
        %s755 = vtos %v754
        %v756 = vstv %s755
        %v757 = vmul.f32 %v668, %v756
        %759 = vset.pattern.permute.xlu0 0
        %760 = vperm.xlu0 %759, %v515
        %v761 = vpop.permute.xlu0 %760
        %v763 = vadd.f32 %v761, %v757
        %v764 = vmul.f32 %v763, 15.0
        %v765 = vlaneseq
        %v766 = vand.u32 %v765, 127
        %v767 = vcvt.s32.f32 %v766
        %vm768 = vcmask 31744
        %v769 = vsel %vm768, %v749, -inf
        %770 = vmax.xlane.f32.xlu0 %v769
        %v771 = vpop.xlane.xlu0 %770
        %v772 = vsub.f32 %v749, %v771
        %v773 = vmul.f32 %v772, 1.442695
        %v774 = vpow.pop %v773
        %v775 = vsel %vm768, %v774, 0.0
        %776 = vadd.xlane.f32.xlu0 %v775
        %v777 = vpop.xlane.xlu0 %776
        %v778 = vrcp.pop %v777
        %v779 = vmul.f32 %v774, %v778
        %781 = vset.pattern.permute.xlu0 0
        %782 = vperm.xlu0 %781, %v764
        %v783 = vpop.permute.xlu0 %782
        %v785 = vsub.f32 %v783, %v767
        %v786 = vand.u32 2147483647, %v785
        %v787 = vsub.f32 1.0, %v786
        %v788 = vmax.f32 %v787, 0.0
        %790 = vset.pattern.permute.xlu0 0
        %791 = vperm.xlu0 %790, %v779
        %v792 = vpop.permute.xlu0 %791
        %v794 = vmul.f32 %v788, %v792
        %v795 = vadd.f32 %v794, 0.0
        %796 = vset.pattern.permute.xlu0 1
        %797 = vperm.xlu0 %796, %v764
        %v798 = vpop.permute.xlu0 %797
        %v800 = vsub.f32 %v798, %v767
        %v801 = vand.u32 2147483647, %v800
        %v802 = vsub.f32 1.0, %v801
        %v803 = vmax.f32 %v802, 0.0
        %804 = vset.pattern.permute.xlu0 1
        %805 = vperm.xlu0 %804, %v779
        %v806 = vpop.permute.xlu0 %805
        %v808 = vmul.f32 %v803, %v806
        %v809 = vadd.f32 %v795, %v808
        %810 = vset.pattern.permute.xlu0 2
        %811 = vperm.xlu0 %810, %v764
        %v812 = vpop.permute.xlu0 %811
        %v814 = vsub.f32 %v812, %v767
        %v815 = vand.u32 2147483647, %v814
        %v816 = vsub.f32 1.0, %v815
        %v817 = vmax.f32 %v816, 0.0
        %818 = vset.pattern.permute.xlu0 2
        %819 = vperm.xlu0 %818, %v779
        %v820 = vpop.permute.xlu0 %819
        %v822 = vmul.f32 %v817, %v820
        %v823 = vadd.f32 %v809, %v822
        %824 = vset.pattern.permute.xlu0 3
        %825 = vperm.xlu0 %824, %v764
        %v826 = vpop.permute.xlu0 %825
        %v828 = vsub.f32 %v826, %v767
        %v829 = vand.u32 2147483647, %v828
        %v830 = vsub.f32 1.0, %v829
        %v831 = vmax.f32 %v830, 0.0
        %832 = vset.pattern.permute.xlu0 3
        %833 = vperm.xlu0 %832, %v779
        %v834 = vpop.permute.xlu0 %833
        %v836 = vmul.f32 %v831, %v834
        %v837 = vadd.f32 %v823, %v836
        %v838 = vpack.c.bf16 %v837, %v837
        %v839 = vpack.c.bf16 %v586, %v585
        %vm840 = vcmask 130048
        %v842 = vsel %vm840, %v838, 0
        %844 = vmatprep.subr.bf16.mxu0 0
        %845 = vmatpush1.bf16.msra.mxu0 0
        %846 = vmatprep.subr.bf16.mxu0 0
        %847 = vmatpush1.bf16.msra.mxu0 0
        %848 = vmatprep.subr.bf16.mxu0 0
        %849 = vmatpush1.bf16.msra.mxu0 0
        %850 = vmatprep.subr.bf16.mxu0 0
        %851 = vmatpush1.bf16.msra.mxu0 0
        %852 = vmatprep.subr.bf16.mxu0 0
        %853 = vmatpush1.bf16.msra.mxu0 0
        %854 = vmatprep.subr.bf16.mxu0 0
        %855 = vmatpush1.bf16.msra.mxu0 0
        %856 = vmatprep.subr.bf16.mxu0 0
        %857 = vmatpush1.bf16.msra.mxu0 0
        %858 = vmatprep.subr.bf16.mxu0 0
        %859 = vmatpush1.bf16.msra.mxu0 %v839
        %860 = vmatprep.subr.bf16.mxu0 0
        %861 = vmatpush2.bf16.msra.mxu0 0
        %862 = vmatprep.subr.bf16.mxu0 0
        %863 = vmatpush2.bf16.msra.mxu0 0
        %864 = vmatprep.subr.bf16.mxu0 0
        %865 = vmatpush2.bf16.msra.mxu0 0
        %866 = vmatprep.subr.bf16.mxu0 0
        %867 = vmatpush2.bf16.msra.mxu0 0
        %868 = vmatprep.subr.bf16.mxu0 0
        %869 = vmatpush2.bf16.msra.mxu0 0
        %870 = vmatprep.subr.bf16.mxu0 0
        %871 = vmatpush2.bf16.msra.mxu0 0
        %872 = vmatprep.subr.bf16.mxu0 0
        %873 = vmatpush2.bf16.msra.mxu0 0
        %874 = vmatprep.subr.bf16.mxu0 0
        %875 = vmatpush2.bf16.msra.mxu0 0
        %876 = vmatprep.mubr.bf16.mxu0 0
        %877 = vmatmul.mubr.bf16.gmra.mxu0 %v842
        %v878 = vpop.f32.mrf.mxu0
        %v879 = vadd.f32 0.0, %v878
        %v880 = vpop.f32.mrf.mxu0
        %v881 = vpop.f32.mrf.mxu0
        %v882 = vpop.f32.mrf.mxu0
        %883 = vdwg.mxu0
        %vm884 = vcmask 64544
        %v885 = vsel %vm884, %v749, -inf
        %886 = vmax.xlane.f32.xlu0 %v885
        %v887 = vpop.xlane.xlu0 %886
        %v888 = vsub.f32 %v749, %v887
        %v889 = vmul.f32 %v888, 1.442695
        %v890 = vpow.pop %v889
        %892 = vrot.lane.b32.xlu0 %v890, 124
        %v893 = vpop.permute.xlu0 %892
        %v895 = vsel %vm768, %v893, 0.0
        %896 = vadd.xlane.f32.xlu0 %v895
        %v897 = vpop.xlane.xlu0 %896
        %v898 = vrcp.pop %v897
        %v899 = vmul.f32 %v890, %v898
        %900 = vset.pattern.permute.xlu0 4
        %901 = vperm.xlu0 %900, %v764
        %v902 = vpop.permute.xlu0 %901
        %v904 = vsub.f32 %v902, %v767
        %v905 = vand.u32 2147483647, %v904
        %v906 = vsub.f32 1.0, %v905
        %v907 = vmax.f32 %v906, 0.0
        %909 = vset.pattern.permute.xlu0 4
        %910 = vperm.xlu0 %909, %v899
        %v911 = vpop.permute.xlu0 %910
        %v913 = vmul.f32 %v907, %v911
        %v914 = vadd.f32 %v913, 0.0
        %915 = vset.pattern.permute.xlu0 5
        %916 = vperm.xlu0 %915, %v764
        %v917 = vpop.permute.xlu0 %916
        %v919 = vsub.f32 %v917, %v767
        %v920 = vand.u32 2147483647, %v919
        %v921 = vsub.f32 1.0, %v920
        %v922 = vmax.f32 %v921, 0.0
        %923 = vset.pattern.permute.xlu0 5
        %924 = vperm.xlu0 %923, %v899
        %v925 = vpop.permute.xlu0 %924
        %v927 = vmul.f32 %v922, %v925
        %v928 = vadd.f32 %v914, %v927
        %929 = vset.pattern.permute.xlu0 6
        %930 = vperm.xlu0 %929, %v764
        %v931 = vpop.permute.xlu0 %930
        %v933 = vsub.f32 %v931, %v767
        %v934 = vand.u32 2147483647, %v933
        %v935 = vsub.f32 1.0, %v934
        %v936 = vmax.f32 %v935, 0.0
        %937 = vset.pattern.permute.xlu0 6
        %938 = vperm.xlu0 %937, %v899
        %v939 = vpop.permute.xlu0 %938
        %v941 = vmul.f32 %v936, %v939
        %v942 = vadd.f32 %v928, %v941
        %943 = vset.pattern.permute.xlu0 7
        %944 = vperm.xlu0 %943, %v764
        %v945 = vpop.permute.xlu0 %944
        %v947 = vsub.f32 %v945, %v767
        %v948 = vand.u32 2147483647, %v947
        %v949 = vsub.f32 1.0, %v948
        %v950 = vmax.f32 %v949, 0.0
        %951 = vset.pattern.permute.xlu0 7
        %952 = vperm.xlu0 %951, %v899
        %v953 = vpop.permute.xlu0 %952
        %v955 = vmul.f32 %v950, %v953
        %v956 = vadd.f32 %v942, %v955
        %v957 = vpack.c.bf16 %v956, %v956
        %959 = vrot.lane.b32.xlu0 %v839, 120
        %v960 = vpop.permute.xlu0 %959
        %v963 = vsel %vm840, %v957, 0
        %965 = vmatprep.subr.bf16.mxu0 0
        %966 = vmatpush1.bf16.msra.mxu0 0
        %967 = vmatprep.subr.bf16.mxu0 0
        %968 = vmatpush1.bf16.msra.mxu0 0
        %969 = vmatprep.subr.bf16.mxu0 0
        %970 = vmatpush1.bf16.msra.mxu0 0
        %971 = vmatprep.subr.bf16.mxu0 0
        %972 = vmatpush1.bf16.msra.mxu0 0
        %973 = vmatprep.subr.bf16.mxu0 0
        %974 = vmatpush1.bf16.msra.mxu0 0
        %975 = vmatprep.subr.bf16.mxu0 0
        %976 = vmatpush1.bf16.msra.mxu0 0
        %977 = vmatprep.subr.bf16.mxu0 0
        %978 = vmatpush1.bf16.msra.mxu0 0
        %979 = vmatprep.subr.bf16.mxu0 0
        %980 = vmatpush1.bf16.msra.mxu0 %v960
        %981 = vmatprep.subr.bf16.mxu0 0
        %982 = vmatpush2.bf16.msra.mxu0 0
        %983 = vmatprep.subr.bf16.mxu0 0
        %984 = vmatpush2.bf16.msra.mxu0 0
        %985 = vmatprep.subr.bf16.mxu0 0
        %986 = vmatpush2.bf16.msra.mxu0 0
        %987 = vmatprep.subr.bf16.mxu0 0
        %988 = vmatpush2.bf16.msra.mxu0 0
        %989 = vmatprep.subr.bf16.mxu0 0
        %990 = vmatpush2.bf16.msra.mxu0 0
        %991 = vmatprep.subr.bf16.mxu0 0
        %992 = vmatpush2.bf16.msra.mxu0 0
        %993 = vmatprep.subr.bf16.mxu0 0
        %994 = vmatpush2.bf16.msra.mxu0 0
        %995 = vmatprep.subr.bf16.mxu0 0
        %996 = vmatpush2.bf16.msra.mxu0 0
        %997 = vmatprep.mubr.bf16.mxu0 0
        %998 = vmatmul.mubr.bf16.gmra.mxu0 %v963
        %v999 = vpop.f32.mrf.mxu0
        %v1000 = vadd.f32 0.0, %v999
        %v1001 = vpop.f32.mrf.mxu0
        %v1002 = vpop.f32.mrf.mxu0
        %v1003 = vpop.f32.mrf.mxu0
        %1004 = vdwg.mxu0
        %vm1005 = vcmask 97344
        %v1006 = vsel %vm1005, %v749, -inf
        %1007 = vmax.xlane.f32.xlu0 %v1006
        %v1008 = vpop.xlane.xlu0 %1007
        %v1009 = vsub.f32 %v749, %v1008
        %v1010 = vmul.f32 %v1009, 1.442695
        %v1011 = vpow.pop %v1010
        %1013 = vrot.lane.b32.xlu0 %v1011, 120
        %v1014 = vpop.permute.xlu0 %1013
        %v1016 = vsel %vm768, %v1014, 0.0
        %1017 = vadd.xlane.f32.xlu0 %v1016
        %v1018 = vpop.xlane.xlu0 %1017
        %v1019 = vrcp.pop %v1018
        %v1020 = vmul.f32 %v1011, %v1019
        %1021 = vset.pattern.permute.xlu0 8
        %1022 = vperm.xlu0 %1021, %v764
        %v1023 = vpop.permute.xlu0 %1022
        %v1025 = vsub.f32 %v1023, %v767
        %v1026 = vand.u32 2147483647, %v1025
        %v1027 = vsub.f32 1.0, %v1026
        %v1028 = vmax.f32 %v1027, 0.0
        %1030 = vset.pattern.permute.xlu0 8
        %1031 = vperm.xlu0 %1030, %v1020
        %v1032 = vpop.permute.xlu0 %1031
        %v1034 = vmul.f32 %v1028, %v1032
        %v1035 = vadd.f32 %v1034, 0.0
        %1036 = vset.pattern.permute.xlu0 9
        %1037 = vperm.xlu0 %1036, %v764
        %v1038 = vpop.permute.xlu0 %1037
        %v1040 = vsub.f32 %v1038, %v767
        %v1041 = vand.u32 2147483647, %v1040
        %v1042 = vsub.f32 1.0, %v1041
        %v1043 = vmax.f32 %v1042, 0.0
        %1044 = vset.pattern.permute.xlu0 9
        %1045 = vperm.xlu0 %1044, %v1020
        %v1046 = vpop.permute.xlu0 %1045
        %v1048 = vmul.f32 %v1043, %v1046
        %v1049 = vadd.f32 %v1035, %v1048
        %1050 = vset.pattern.permute.xlu0 10
        %1051 = vperm.xlu0 %1050, %v764
        %v1052 = vpop.permute.xlu0 %1051
        %v1054 = vsub.f32 %v1052, %v767
        %v1055 = vand.u32 2147483647, %v1054
        %v1056 = vsub.f32 1.0, %v1055
        %v1057 = vmax.f32 %v1056, 0.0
        %1058 = vset.pattern.permute.xlu0 10
        %1059 = vperm.xlu0 %1058, %v1020
        %v1060 = vpop.permute.xlu0 %1059
        %v1062 = vmul.f32 %v1057, %v1060
        %v1063 = vadd.f32 %v1049, %v1062
        %1064 = vset.pattern.permute.xlu0 11
        %1065 = vperm.xlu0 %1064, %v764
        %v1066 = vpop.permute.xlu0 %1065
        %v1068 = vsub.f32 %v1066, %v767
        %v1069 = vand.u32 2147483647, %v1068
        %v1070 = vsub.f32 1.0, %v1069
        %v1071 = vmax.f32 %v1070, 0.0
        %1072 = vset.pattern.permute.xlu0 11
        %1073 = vperm.xlu0 %1072, %v1020
        %v1074 = vpop.permute.xlu0 %1073
        %v1076 = vmul.f32 %v1071, %v1074
        %v1077 = vadd.f32 %v1063, %v1076
        %v1078 = vpack.c.bf16 %v1077, %v1077
        %1079 = vrot.lane.b32.xlu0 %v839, 112
        %v1080 = vpop.permute.xlu0 %1079
        %v1083 = vsel %vm840, %v1078, 0
        %1085 = vmatprep.subr.bf16.mxu0 0
        %1086 = vmatpush1.bf16.msra.mxu0 0
        %1087 = vmatprep.subr.bf16.mxu0 0
        %1088 = vmatpush1.bf16.msra.mxu0 0
        %1089 = vmatprep.subr.bf16.mxu0 0
        %1090 = vmatpush1.bf16.msra.mxu0 0
        %1091 = vmatprep.subr.bf16.mxu0 0
        %1092 = vmatpush1.bf16.msra.mxu0 0
        %1093 = vmatprep.subr.bf16.mxu0 0
        %1094 = vmatpush1.bf16.msra.mxu0 0
        %1095 = vmatprep.subr.bf16.mxu0 0
        %1096 = vmatpush1.bf16.msra.mxu0 0
        %1097 = vmatprep.subr.bf16.mxu0 0
        %1098 = vmatpush1.bf16.msra.mxu0 0
        %1099 = vmatprep.subr.bf16.mxu0 0
        %1100 = vmatpush1.bf16.msra.mxu0 %v1080
        %1101 = vmatprep.subr.bf16.mxu0 0
        %1102 = vmatpush2.bf16.msra.mxu0 0
        %1103 = vmatprep.subr.bf16.mxu0 0
        %1104 = vmatpush2.bf16.msra.mxu0 0
        %1105 = vmatprep.subr.bf16.mxu0 0
        %1106 = vmatpush2.bf16.msra.mxu0 0
        %1107 = vmatprep.subr.bf16.mxu0 0
        %1108 = vmatpush2.bf16.msra.mxu0 0
        %1109 = vmatprep.subr.bf16.mxu0 0
        %1110 = vmatpush2.bf16.msra.mxu0 0
        %1111 = vmatprep.subr.bf16.mxu0 0
        %1112 = vmatpush2.bf16.msra.mxu0 0
        %1113 = vmatprep.subr.bf16.mxu0 0
        %1114 = vmatpush2.bf16.msra.mxu0 0
        %1115 = vmatprep.subr.bf16.mxu0 0
        %1116 = vmatpush2.bf16.msra.mxu0 0
        %1117 = vmatprep.mubr.bf16.mxu0 0
        %1118 = vmatmul.mubr.bf16.gmra.mxu0 %v1083
        %v1119 = vpop.f32.mrf.mxu0
        %v1120 = vadd.f32 0.0, %v1119
        %v1121 = vpop.f32.mrf.mxu0
        %v1122 = vpop.f32.mrf.mxu0
        %v1123 = vpop.f32.mrf.mxu0
        %1124 = vdwg.mxu0
        %vm1125 = vcmask 130144
        %v1126 = vsel %vm1125, %v749, -inf
        %1127 = vmax.xlane.f32.xlu0 %v1126
        %v1128 = vpop.xlane.xlu0 %1127
        %v1129 = vsub.f32 %v749, %v1128
        %v1130 = vmul.f32 %v1129, 1.442695
        %v1131 = vpow.pop %v1130
        %1133 = vrot.lane.b32.xlu0 %v1131, 116
        %v1134 = vpop.permute.xlu0 %1133
        %v1136 = vsel %vm768, %v1134, 0.0
        %1137 = vadd.xlane.f32.xlu0 %v1136
        %v1138 = vpop.xlane.xlu0 %1137
        %v1139 = vrcp.pop %v1138
        %v1140 = vmul.f32 %v1131, %v1139
        %1141 = vset.pattern.permute.xlu0 12
        %1142 = vperm.xlu0 %1141, %v764
        %v1143 = vpop.permute.xlu0 %1142
        %v1145 = vsub.f32 %v1143, %v767
        %v1146 = vand.u32 2147483647, %v1145
        %v1147 = vsub.f32 1.0, %v1146
        %v1148 = vmax.f32 %v1147, 0.0
        %1150 = vset.pattern.permute.xlu0 12
        %1151 = vperm.xlu0 %1150, %v1140
        %v1152 = vpop.permute.xlu0 %1151
        %v1154 = vmul.f32 %v1148, %v1152
        %v1155 = vadd.f32 %v1154, 0.0
        %1156 = vset.pattern.permute.xlu0 13
        %1157 = vperm.xlu0 %1156, %v764
        %v1158 = vpop.permute.xlu0 %1157
        %v1160 = vsub.f32 %v1158, %v767
        %v1161 = vand.u32 2147483647, %v1160
        %v1162 = vsub.f32 1.0, %v1161
        %v1163 = vmax.f32 %v1162, 0.0
        %1164 = vset.pattern.permute.xlu0 13
        %1165 = vperm.xlu0 %1164, %v1140
        %v1166 = vpop.permute.xlu0 %1165
        %v1168 = vmul.f32 %v1163, %v1166
        %v1169 = vadd.f32 %v1155, %v1168
        %1170 = vset.pattern.permute.xlu0 14
        %1171 = vperm.xlu0 %1170, %v764
        %v1172 = vpop.permute.xlu0 %1171
        %v1174 = vsub.f32 %v1172, %v767
        %v1175 = vand.u32 2147483647, %v1174
        %v1176 = vsub.f32 1.0, %v1175
        %v1177 = vmax.f32 %v1176, 0.0
        %1178 = vset.pattern.permute.xlu0 14
        %1179 = vperm.xlu0 %1178, %v1140
        %v1180 = vpop.permute.xlu0 %1179
        %v1182 = vmul.f32 %v1177, %v1180
        %v1183 = vadd.f32 %v1169, %v1182
        %1184 = vset.pattern.permute.xlu0 15
        %1185 = vperm.xlu0 %1184, %v764
        %v1186 = vpop.permute.xlu0 %1185
        %v1188 = vsub.f32 %v1186, %v767
        %v1189 = vand.u32 2147483647, %v1188
        %v1190 = vsub.f32 1.0, %v1189
        %v1191 = vmax.f32 %v1190, 0.0
        %1192 = vset.pattern.permute.xlu0 15
        %1193 = vperm.xlu0 %1192, %v1140
        %v1194 = vpop.permute.xlu0 %1193
        %v1196 = vmul.f32 %v1191, %v1194
        %v1197 = vadd.f32 %v1183, %v1196
        %v1198 = vpack.c.bf16 %v1197, %v1197
        %1199 = vrot.lane.b32.xlu0 %v839, 104
        %v1200 = vpop.permute.xlu0 %1199
        %v1203 = vsel %vm840, %v1198, 0
        %1205 = vmatprep.subr.bf16.mxu0 0
        %1206 = vmatpush1.bf16.msra.mxu0 0
        %1207 = vmatprep.subr.bf16.mxu0 0
        %1208 = vmatpush1.bf16.msra.mxu0 0
        %1209 = vmatprep.subr.bf16.mxu0 0
        %1210 = vmatpush1.bf16.msra.mxu0 0
        %1211 = vmatprep.subr.bf16.mxu0 0
        %1212 = vmatpush1.bf16.msra.mxu0 0
        %1213 = vmatprep.subr.bf16.mxu0 0
        %1214 = vmatpush1.bf16.msra.mxu0 0
        %1215 = vmatprep.subr.bf16.mxu0 0
        %1216 = vmatpush1.bf16.msra.mxu0 0
        %1217 = vmatprep.subr.bf16.mxu0 0
        %1218 = vmatpush1.bf16.msra.mxu0 0
        %1219 = vmatprep.subr.bf16.mxu0 0
        %1220 = vmatpush1.bf16.msra.mxu0 %v1200
        %1221 = vmatprep.subr.bf16.mxu0 0
        %1222 = vmatpush2.bf16.msra.mxu0 0
        %1223 = vmatprep.subr.bf16.mxu0 0
        %1224 = vmatpush2.bf16.msra.mxu0 0
        %1225 = vmatprep.subr.bf16.mxu0 0
        %1226 = vmatpush2.bf16.msra.mxu0 0
        %1227 = vmatprep.subr.bf16.mxu0 0
        %1228 = vmatpush2.bf16.msra.mxu0 0
        %1229 = vmatprep.subr.bf16.mxu0 0
        %1230 = vmatpush2.bf16.msra.mxu0 0
        %1231 = vmatprep.subr.bf16.mxu0 0
        %1232 = vmatpush2.bf16.msra.mxu0 0
        %1233 = vmatprep.subr.bf16.mxu0 0
        %1234 = vmatpush2.bf16.msra.mxu0 0
        %1235 = vmatprep.subr.bf16.mxu0 0
        %1236 = vmatpush2.bf16.msra.mxu0 0
        %1237 = vmatprep.mubr.bf16.mxu0 0
        %1238 = vmatmul.mubr.bf16.gmra.mxu0 %v1203
        %v1239 = vpop.f32.mrf.mxu0
        %v1240 = vadd.f32 0.0, %v1239
        %v1241 = vpop.f32.mrf.mxu0
        %v1242 = vpop.f32.mrf.mxu0
        %v1243 = vpop.f32.mrf.mxu0
        %1244 = vdwg.mxu0
        %1246 = vrot.lane.b32.xlu0 %v1000, 8
        %v1247 = vpop.permute.xlu0 %1246
        %1250 = vrot.lane.b32.xlu0 %v1120, 16
        %v1251 = vpop.permute.xlu0 %1250
        %1254 = vrot.lane.b32.xlu0 %v1240, 24
        %v1255 = vpop.permute.xlu0 %1254
        %vm1257 = vcmask 64512
        %v1258 = vsel %vm1257, %v879, %v1247
        %v1259 = vsel %vm840, %v1258, %v1251
        %vm1260 = vcmask 195584
        %v1261 = vsel %vm1260, %v1259, %v1255
        %v1262 = vpack.c.bf16 %v1261, %v1261
        %v1263 = vld [vmem:[%s11] sm:$0xff]
        %v1264 = vld [vmem:[%s11 + $0x8] sm:$0xff]
        %v1265 = vld [vmem:[%s11 + $0x10] sm:$0xff]
        %v1266 = vld [vmem:[%s11 + $0x18] sm:$0xff]
        %v1267 = vpack.c.bf16 %v1264, %v1263
        %v1268 = vpack.c.bf16 %v1266, %v1265
        %v1269 = vld [vmem:[%s12] sm:$0x1]
        %v1271 = vlaneseq
        %v1272 = vshrl.u32 %v1271, 7
        %v1273 = vsub.s32 0, %v1272
        %v1274 = vrot.slane %v1269, %v1273
        %v1277 = vsel %vm530, %v1262, 0
        %1279 = vmatprep.subr.bf16.mxu0 0
        %1280 = vmatpush1.bf16.msra.mxu0 0
        %1281 = vmatprep.subr.bf16.mxu0 0
        %1282 = vmatpush1.bf16.msra.mxu0 0
        %1283 = vmatprep.subr.bf16.mxu0 0
        %1284 = vmatpush1.bf16.msra.mxu0 0
        %1285 = vmatprep.subr.bf16.mxu0 0
        %1286 = vmatpush1.bf16.msra.mxu0 0
        %1287 = vmatprep.subr.bf16.mxu0 0
        %1288 = vmatpush1.bf16.msra.mxu0 0
        %1289 = vmatprep.subr.bf16.mxu0 0
        %1290 = vmatpush1.bf16.msra.mxu0 0
        %1291 = vmatprep.subr.bf16.mxu0 0
        %1292 = vmatpush1.bf16.msra.mxu0 %v1268
        %1293 = vmatprep.subr.bf16.mxu0 0
        %1294 = vmatpush1.bf16.msra.mxu0 %v1267
        %1295 = vmatprep.subr.bf16.mxu0 0
        %1296 = vmatpush2.bf16.msra.mxu0 0
        %1297 = vmatprep.subr.bf16.mxu0 0
        %1298 = vmatpush2.bf16.msra.mxu0 0
        %1299 = vmatprep.subr.bf16.mxu0 0
        %1300 = vmatpush2.bf16.msra.mxu0 0
        %1301 = vmatprep.subr.bf16.mxu0 0
        %1302 = vmatpush2.bf16.msra.mxu0 0
        %1303 = vmatprep.subr.bf16.mxu0 0
        %1304 = vmatpush2.bf16.msra.mxu0 0
        %1305 = vmatprep.subr.bf16.mxu0 0
        %1306 = vmatpush2.bf16.msra.mxu0 0
        %1307 = vmatprep.subr.bf16.mxu0 0
        %1308 = vmatpush2.bf16.msra.mxu0 0
        %1309 = vmatprep.subr.bf16.mxu0 0
        %1310 = vmatpush2.bf16.msra.mxu0 0
        %1311 = vmatprep.mubr.bf16.mxu0 0
        %1312 = vmatmul.mubr.bf16.gmra.mxu0 %v1277
        %v1313 = vpop.f32.mrf.mxu0
        %v1314 = vadd.f32 %v1274, %v1313
        %v1315 = vpop.f32.mrf.mxu0
        %v1316 = vpop.f32.mrf.mxu0
        %v1317 = vpop.f32.mrf.mxu0
        %1318 = vdwg.mxu0
        %1319 = vst.msk [vmem:[%s484] sm:$0xff] %vm530, %v1314
        %s1320 = sand.u32 %s331, 1
        %s1321 = scalar_lea.sflag [#allocation5], %s1320
        %s1322 = sand.u32 %s331, 1
        %s1323 = smul.addr %s1322, 8
        %s1324 = scalar_lea.vmem [#allocation4], %s1323
        // Predicated region
        $region69: #{tpu_custom_call.1} parent=67 // pred_check
          %p1325 = pneg %p341
        $region70: #{tpu_custom_call.1} parent=67 // pred_check_branch
          %1327 = sbr.rel (%p1325) target = $region72
        $region71: #{tpu_custom_call.1} parent=67 // pred_region
          %s1329 = ssub.s32 128, 128
          %1330 = vsyncadd %s1321, %s1329
          %s1331 = sadd.s32 %s38, %s37
          %s1332 = smul.addr %s1331, 128
          %s1333 = scalar_lea.hbm %s13, %s1332
          %s1335 = sshll.u32 %s1324, 4
          %s1336 = int_to_ptr.vmem [resolvable:$true] %s1335
          %1338 = dma.vmem_to_hbm [thread:$0]  %s1336, 128, %s1333, %s1321
        $region72: #{tpu_custom_call.1} parent=67 // pred_fallthru
          _
      $region68: #{tpu_custom_call.1} parent=5 // pred_fallthru
        _
      %p1339 = scmp.le.s32.totalorder 2, %s28
      // Predicated region
      $region73: #{tpu_custom_call.1} parent=5 // pred_check
        %p1340 = pneg %p1339
      $region74: #{tpu_custom_call.1} parent=5 // pred_check_branch
        %1342 = sbr.rel (%p1340) target = $region76
      $region75: #{tpu_custom_call.1} parent=5 // pred_region
        %s1343 = ssub.s32 %s28, 2
        // Predicated region
        $region77: #{tpu_custom_call.1} parent=75 // pred_check
          %p1344 = pneg %p347
        $region78: #{tpu_custom_call.1} parent=75 // pred_check_branch
          %1346 = sbr.rel (%p1344) target = $region80
        $region79: #{tpu_custom_call.1} parent=75 // pred_region
          %s1347 = sand.u32 %s332, 1
          %s1348 = scalar_lea.sflag [#allocation5], %s1347
          %s1349 = sand.u32 %s332, 1
          %s1350 = smul.addr %s1349, 8
          %s1351 = scalar_lea.vmem [#allocation4], %s1350
          %1352 = dma.done %s1348, 128
        $region80: #{tpu_custom_call.1} parent=75 // pred_fallthru
          _
      $region76: #{tpu_custom_call.1} parent=5 // pred_fallthru
        _
    $region6: #{tpu_custom_call.1} parent=1 // loop_footer
      %s32 = sadd.s32 1, %s28
    $region7: #{tpu_custom_call.1} parent=1 // loop_footer_branch
      %27 = sbr.rel target = $region3
    $region8: #{tpu_custom_call.1} parent=1 // loop_exit
      _
    %1353 = vsyncpa [#allocation5], 1
    %s1354 = scalar_lea.sflag [#allocation5], 1
    %1355 = vsyncpa %s1354, 1

</llo_original>
